<compile_context>
chip_gen: v6e
topology: v6e:2x2x1
jax: 0.10.0
libtpu: 0.0.40
codegen_flags: <defaults>
</compile_context>

<pallas_src>
import functools

import jax
import jax.numpy as jnp
from jax import lax
from jax.experimental import pallas as pl
from jax.experimental.pallas import tpu as pltpu

K = 7      # conv kernel size
PAD = 3    # padding on each side


def _basic_block1d_kernel(x_ref, w1_ref, b1_ref, w2_ref, b2_ref, out_ref, *,
                          L, S, compute_dtype):
    # x_ref   : (Bt, Cin, L)       raw input block (f32), halo synthesized here
    # w1_ref  : (K, planes, Cin)   conv1 weights per tap, BN1 scale folded in
    # b1_ref  : (planes, 1)        folded BN1 bias (f32)
    # w2_ref  : (K, planes, planes) conv2 weights per tap, BN2 scale folded in
    # b2_ref  : (planes, 1)        folded BN2 bias (f32)
    # out_ref : (Bt, planes, S)    lane-aligned output; valid lanes are [0, L)
    Cin = x_ref.shape[1]
    planes = out_ref.shape[1]
    Bt = x_ref.shape[0]

    # Lane-validity mask: lanes [0, L) hold data, [L, S) is halo/scratch.
    lane = lax.broadcasted_iota(jnp.int32, (1, S), 1)
    valid = lane < L

    b1 = b1_ref[...]          # (planes, 1) f32
    b2 = b2_ref[...]          # (planes, 1) f32

    def conv(slab, w_ref):
        # 'same' conv with zero padding, expressed as K accumulating MXU
        # matmuls over circularly rolled slabs. Because the slab is zero on
        # lanes [L, S) and S >= L + 2*PAD, every valid output lane [0, L) only
        # ever reads in-segment data or physical zeros (wrap-around lanes land
        # in the zero tail), so the circular roll is exact for valid lanes.
        acc = jnp.zeros((planes, S), jnp.float32)
        for k in range(K):                      # K=7 taps, kept unrolled
            shift = (PAD - k) % S
            shifted = slab if shift == 0 else pltpu.roll(slab, shift, axis=1)
            acc = acc + jnp.dot(w_ref[k], shifted,
                                preferred_element_type=jnp.float32)
        return acc

    def body(i, carry):
        x_f32 = x_ref[i].astype(jnp.float32)                       # (Cin, L)
        # Residual / padded slab in f32 (residual add stays full precision).
        res = jnp.concatenate(
            [x_f32, jnp.zeros((Cin, S - L), jnp.float32)], axis=-1)  # (Cin, S)
        x_slab = res.astype(compute_dtype)

        # conv1 -> bn1 (scale folded, bias here) -> relu
        h = jnp.maximum(conv(x_slab, w1_ref) + b1, 0.0)            # (planes, S)
        # dropout(p=0.2) -> identity in eval mode.
        # Zero the halo lanes so conv2 sees proper zero padding.
        h_slab = jnp.where(valid, h, 0.0).astype(compute_dtype)

        # conv2 -> bn2 -> + residual (f32) -> relu
        y = conv(h_slab, w2_ref) + b2 + res
        out_ref[i] = jnp.maximum(y, 0.0).astype(out_ref.dtype)
        return carry

    lax.fori_loop(0, Bt, body, 0)


def fold_bn(gamma, beta, running_mean, running_var, eps=1e-5):
    scale = gamma / jnp.sqrt(running_var + eps)
    bias = beta - running_mean * scale
    return scale.astype(jnp.float32), bias.astype(jnp.float32)


def basic_block1d(x, w1, bn1_params, w2, bn2_params, *, batch_tile=8,
                  compute_dtype=jnp.float32):
    """x: (B, Cin, L) f32. w1: (planes, Cin, K). w2: (planes, planes, K)."""
    B, Cin, L = x.shape
    planes = w1.shape[0]
    assert Cin == planes, "downsample=None / stride=1 requires inplanes == planes"

    # Per-segment lane stride: multiple of 128 covering the conv halo, so all
    # in-kernel stores are unmasked full-width stores and wrap-around roll lanes
    # land in the zero tail.
    S = ((L + 2 * PAD + 127) // 128) * 128

    # Batch tile: keep >= 2 grid blocks whenever B permits (v7x 2-TC sharding),
    # capped at batch_tile to bound VMEM / per-step block size.
    Bt = max(1, min(batch_tile, B // 2)) if B >= 2 else 1
    nblk = pl.cdiv(B, Bt)
    Bp = nblk * Bt
    if Bp > B:
        # Padded rows compute relu(bias) garbage from zeros; trimmed below.
        x = jnp.pad(x, ((0, Bp - B), (0, 0), (0, 0)))

    # Fold eval-mode BN scales into the (bias-free) conv weights; taps lead so
    # the kernel reads one (planes, Cin) matrix per tap.
    s1, b1 = fold_bn(*bn1_params)
    s2, b2 = fold_bn(*bn2_params)
    w1_k = (jnp.transpose(w1, (2, 0, 1)) * s1[None, :, None]).astype(compute_dtype)
    w2_k = (jnp.transpose(w2, (2, 0, 1)) * s2[None, :, None]).astype(compute_dtype)
    b1 = b1[:, None]          # (planes, 1) f32
    b2 = b2[:, None]          # (planes, 1) f32

    kernel = functools.partial(_basic_block1d_kernel, L=L, S=S,
                               compute_dtype=compute_dtype)

    # TODO(synk): for very long L on v7x (64 MiB VMEM), add an L-tiling grid
    # axis with a PAD halo in the x index_map instead of loading full rows.
    # TODO(synk): for very small Cin (< ~32) an im2col variant (contraction
    # depth K*Cin) would feed the MXU better; at those sizes the block is
    # memory-bound anyway, so the tap-matmul path is kept for simplicity.
    grid_spec = pltpu.PrefetchScalarGridSpec(
        num_scalar_prefetch=0,
        grid=(nblk,),
        in_specs=[
            pl.BlockSpec((Bt, Cin, L), lambda b: (b, 0, 0)),
            pl.BlockSpec((K, planes, Cin), lambda b: (0, 0, 0)),
            pl.BlockSpec((planes, 1), lambda b: (0, 0)),
            pl.BlockSpec((K, planes, planes), lambda b: (0, 0, 0)),
            pl.BlockSpec((planes, 1), lambda b: (0, 0)),
        ],
        out_specs=pl.BlockSpec((Bt, planes, S), lambda b: (b, 0, 0)),
    )

    out = pl.pallas_call(
        kernel,
        out_shape=jax.ShapeDtypeStruct((Bp, planes, S), jnp.float32),
        grid_spec=grid_spec,
        compiler_params=pltpu.CompilerParams(
            dimension_semantics=("parallel",),     # batch blocks are independent
            vmem_limit_bytes=48 * 1024 * 1024,     # safe on v5e/v6e/v7x
        ),
    )(x, w1_k, b1, w2_k, b2)

    # Valid outputs live in lanes [0, L); trailing lanes and padded batch rows
    # are scratch. Plain slice — no transpose pass.
    return out[:B, :, :L]


def reference_basic_block1d(x, w1, bn1_params, w2, bn2_params):
    """Pure-JAX reference (matches PyTorch eval-mode forward)."""
    def conv1d(inp, w):
        return lax.conv_general_dilated(
            inp, w, window_strides=(1,), padding=[(PAD, PAD)],
            dimension_numbers=("NCH", "OIH", "NCH"))

    def bn(inp, params):
        gamma, beta, mean, var = params
        return (inp - mean[None, :, None]) / jnp.sqrt(var[None, :, None] + 1e-5) \
               * gamma[None, :, None] + beta[None, :, None]

    out = conv1d(x, w1)
    out = jnp.maximum(bn(out, bn1_params), 0.0)   # dropout = identity in eval
    out = conv1d(out, w2)
    out = bn(out, bn2_params)
    out = out + x
    return jnp.maximum(out, 0.0)


if __name__ == "__main__":
    B, C, L = 2, 8, 16          # inplanes = planes = 8, stride=1, downsample=None
    planes = C

    key = jax.random.PRNGKey(0)
    kx, k1, k2, kg1, kb1, km1, kv1, kg2, kb2, km2, kv2 = jax.random.split(key, 11)

    x = jax.random.normal(kx, (B, C, L), jnp.float32)
    w1 = jax.random.normal(k1, (planes, C, K), jnp.float32) * 0.1
    w2 = jax.random.normal(k2, (planes, planes, K), jnp.float32) * 0.1

    bn1_params = (
        jax.random.uniform(kg1, (planes,), jnp.float32, 0.5, 1.5),   # gamma
        jax.random.normal(kb1, (planes,), jnp.float32) * 0.1,        # beta
        jax.random.normal(km1, (planes,), jnp.float32) * 0.1,        # running_mean
        jax.random.uniform(kv1, (planes,), jnp.float32, 0.5, 1.5),   # running_var
    )
    bn2_params = (
        jax.random.uniform(kg2, (planes,), jnp.float32, 0.5, 1.5),
        jax.random.normal(kb2, (planes,), jnp.float32) * 0.1,
        jax.random.normal(km2, (planes,), jnp.float32) * 0.1,
        jax.random.uniform(kv2, (planes,), jnp.float32, 0.5, 1.5),
    )

    ref = reference_basic_block1d(x, w1, bn1_params, w2, bn2_params)

    # f32 path (tight tolerance)
    out = basic_block1d(x, w1, bn1_params, w2, bn2_params)
    out = jax.block_until_ready(out)
    assert out.shape == (B, planes, L)
    assert jnp.allclose(out, ref, atol=1e-4, rtol=1e-4), "f32 kernel mismatch"

    # bf16 MXU path (v6e/v7x optimization), f32 accumulation + f32 residual.
    out_bf16 = basic_block1d(x, w1, bn1_params, w2, bn2_params,
                             compute_dtype=jnp.bfloat16)
    out_bf16 = jax.block_until_ready(out_bf16)
    assert jnp.allclose(out_bf16, ref, atol=1e-1, rtol=1e-1), "bf16 kernel mismatch"

    print("KERNEL_OK")
</pallas_src>

<mosaic_0001>
module attributes {stable_mosaic.version = 11 : i64} {
  func.func @_basic_block1d_kernel(%arg0: i32, %arg1: memref<1x8x16xf32, #tpu.memory_space<vmem>>, %arg2: memref<7x8x8xf32, #tpu.memory_space<vmem>>, %arg3: memref<8x1xf32, #tpu.memory_space<vmem>>, %arg4: memref<7x8x8xf32, #tpu.memory_space<vmem>>, %arg5: memref<8x1xf32, #tpu.memory_space<vmem>>, %arg6: memref<1x8x128xf32, #tpu.memory_space<vmem>>) attributes {dimension_semantics = [#tpu.dimension_semantics<parallel>], iteration_bounds = array<i64: 2>, scalar_prefetch = 0 : i64, scratch_operands = 0 : i64, tpu.core_type = #tpu.core_type<tc>, window_params = [{transform_indices = @transform_0, window_bounds = array<i64: 1, 8, 16>}, {pipeline_mode = #tpu.pipeline_mode<synchronous>, transform_indices = @transform_1, window_bounds = array<i64: 7, 8, 8>}, {pipeline_mode = #tpu.pipeline_mode<synchronous>, transform_indices = @transform_2, window_bounds = array<i64: 8, 1>}, {pipeline_mode = #tpu.pipeline_mode<synchronous>, transform_indices = @transform_3, window_bounds = array<i64: 7, 8, 8>}, {pipeline_mode = #tpu.pipeline_mode<synchronous>, transform_indices = @transform_4, window_bounds = array<i64: 8, 1>}, {transform_indices = @transform_5, window_bounds = array<i64: 1, 8, 128>}]} {
    %0 = tpu.iota {dimensions = array<i32: 1>} : vector<1x128xi32>
    %c16_i32 = arith.constant 16 : i32
    %1 = vector.broadcast %c16_i32 : i32 to vector<1x128xi32>
    %2 = arith.cmpi slt, %0, %1 : vector<1x128xi32>
    %c0 = arith.constant 0 : index
    %c0_0 = arith.constant 0 : index
    %3 = vector.load %arg3[%c0, %c0_0] : memref<8x1xf32, #tpu.memory_space<vmem>>, vector<8x1xf32>
    %c0_1 = arith.constant 0 : index
    %c0_2 = arith.constant 0 : index
    %4 = vector.load %arg5[%c0_1, %c0_2] : memref<8x1xf32, #tpu.memory_space<vmem>>, vector<8x1xf32>
    %c0_i32 = arith.constant 0 : i32
    %5 = arith.index_cast %c0_i32 : i32 to index
    %c0_3 = arith.constant 0 : index
    %c0_4 = arith.constant 0 : index
    %6 = vector.load %arg1[%5, %c0_3, %c0_4] : memref<1x8x16xf32, #tpu.memory_space<vmem>>, vector<1x8x16xf32>
    %7 = vector.shape_cast %6 : vector<1x8x16xf32> to vector<8x16xf32>
    %cst = arith.constant 0.000000e+00 : f32
    %8 = vector.broadcast %cst : f32 to vector<8x112xf32>
    %9 = tpu.concatenate %7, %8 in 1 : vector<8x16xf32>, vector<8x112xf32> -> vector<8x128xf32>
    %cst_5 = arith.constant 0.000000e+00 : f32
    %10 = vector.broadcast %cst_5 : f32 to vector<8x128xf32>
    %c3_i32 = arith.constant 3 : i32
    %11 = tpu.dynamic_rotate %9 by %c3_i32 dim 1 : vector<8x128xf32>, i32 -> vector<8x128xf32>
    %c0_6 = arith.constant 0 : index
    %c0_7 = arith.constant 0 : index
    %c0_8 = arith.constant 0 : index
    %12 = vector.load %arg2[%c0_6, %c0_7, %c0_8] : memref<7x8x8xf32, #tpu.memory_space<vmem>>, vector<1x8x8xf32>
    %13 = vector.shape_cast %12 : vector<1x8x8xf32> to vector<8x8xf32>
    %cst_9 = arith.constant dense<0.000000e+00> : vector<8x128xf32>
    %14 = tpu.matmul %13, %11, %cst_9 {dimension_numbers = #tpu.dot_dimension_numbers<[1], [0], [0], [1], [0, 0, 1, 1], [], []>} : vector<8x8xf32>, vector<8x128xf32>, vector<8x128xf32> -> vector<8x128xf32>
    %15 = arith.addf %10, %14 : vector<8x128xf32>
    %c2_i32 = arith.constant 2 : i32
    %16 = tpu.dynamic_rotate %9 by %c2_i32 dim 1 : vector<8x128xf32>, i32 -> vector<8x128xf32>
    %c1 = arith.constant 1 : index
    %c0_10 = arith.constant 0 : index
    %c0_11 = arith.constant 0 : index
    %17 = vector.load %arg2[%c1, %c0_10, %c0_11] : memref<7x8x8xf32, #tpu.memory_space<vmem>>, vector<1x8x8xf32>
    %18 = vector.shape_cast %17 : vector<1x8x8xf32> to vector<8x8xf32>
    %cst_12 = arith.constant dense<0.000000e+00> : vector<8x128xf32>
    %19 = tpu.matmul %18, %16, %cst_12 {dimension_numbers = #tpu.dot_dimension_numbers<[1], [0], [0], [1], [0, 0, 1, 1], [], []>} : vector<8x8xf32>, vector<8x128xf32>, vector<8x128xf32> -> vector<8x128xf32>
    %20 = arith.addf %15, %19 : vector<8x128xf32>
    %c1_i32 = arith.constant 1 : i32
    %21 = tpu.dynamic_rotate %9 by %c1_i32 dim 1 : vector<8x128xf32>, i32 -> vector<8x128xf32>
    %c2 = arith.constant 2 : index
    %c0_13 = arith.constant 0 : index
    %c0_14 = arith.constant 0 : index
    %22 = vector.load %arg2[%c2, %c0_13, %c0_14] : memref<7x8x8xf32, #tpu.memory_space<vmem>>, vector<1x8x8xf32>
    %23 = vector.shape_cast %22 : vector<1x8x8xf32> to vector<8x8xf32>
    %cst_15 = arith.constant dense<0.000000e+00> : vector<8x128xf32>
    %24 = tpu.matmul %23, %21, %cst_15 {dimension_numbers = #tpu.dot_dimension_numbers<[1], [0], [0], [1], [0, 0, 1, 1], [], []>} : vector<8x8xf32>, vector<8x128xf32>, vector<8x128xf32> -> vector<8x128xf32>
    %25 = arith.addf %20, %24 : vector<8x128xf32>
    %c3 = arith.constant 3 : index
    %c0_16 = arith.constant 0 : index
    %c0_17 = arith.constant 0 : index
    %26 = vector.load %arg2[%c3, %c0_16, %c0_17] : memref<7x8x8xf32, #tpu.memory_space<vmem>>, vector<1x8x8xf32>
    %27 = vector.shape_cast %26 : vector<1x8x8xf32> to vector<8x8xf32>
    %cst_18 = arith.constant dense<0.000000e+00> : vector<8x128xf32>
    %28 = tpu.matmul %27, %9, %cst_18 {dimension_numbers = #tpu.dot_dimension_numbers<[1], [0], [0], [1], [0, 0, 1, 1], [], []>} : vector<8x8xf32>, vector<8x128xf32>, vector<8x128xf32> -> vector<8x128xf32>
    %29 = arith.addf %25, %28 : vector<8x128xf32>
    %c127_i32 = arith.constant 127 : i32
    %30 = tpu.dynamic_rotate %9 by %c127_i32 dim 1 : vector<8x128xf32>, i32 -> vector<8x128xf32>
    %c4 = arith.constant 4 : index
    %c0_19 = arith.constant 0 : index
    %c0_20 = arith.constant 0 : index
    %31 = vector.load %arg2[%c4, %c0_19, %c0_20] : memref<7x8x8xf32, #tpu.memory_space<vmem>>, vector<1x8x8xf32>
    %32 = vector.shape_cast %31 : vector<1x8x8xf32> to vector<8x8xf32>
    %cst_21 = arith.constant dense<0.000000e+00> : vector<8x128xf32>
    %33 = tpu.matmul %32, %30, %cst_21 {dimension_numbers = #tpu.dot_dimension_numbers<[1], [0], [0], [1], [0, 0, 1, 1], [], []>} : vector<8x8xf32>, vector<8x128xf32>, vector<8x128xf32> -> vector<8x128xf32>
    %34 = arith.addf %29, %33 : vector<8x128xf32>
    %c126_i32 = arith.constant 126 : i32
    %35 = tpu.dynamic_rotate %9 by %c126_i32 dim 1 : vector<8x128xf32>, i32 -> vector<8x128xf32>
    %c5 = arith.constant 5 : index
    %c0_22 = arith.constant 0 : index
    %c0_23 = arith.constant 0 : index
    %36 = vector.load %arg2[%c5, %c0_22, %c0_23] : memref<7x8x8xf32, #tpu.memory_space<vmem>>, vector<1x8x8xf32>
    %37 = vector.shape_cast %36 : vector<1x8x8xf32> to vector<8x8xf32>
    %cst_24 = arith.constant dense<0.000000e+00> : vector<8x128xf32>
    %38 = tpu.matmul %37, %35, %cst_24 {dimension_numbers = #tpu.dot_dimension_numbers<[1], [0], [0], [1], [0, 0, 1, 1], [], []>} : vector<8x8xf32>, vector<8x128xf32>, vector<8x128xf32> -> vector<8x128xf32>
    %39 = arith.addf %34, %38 : vector<8x128xf32>
    %c125_i32 = arith.constant 125 : i32
    %40 = tpu.dynamic_rotate %9 by %c125_i32 dim 1 : vector<8x128xf32>, i32 -> vector<8x128xf32>
    %c6 = arith.constant 6 : index
    %c0_25 = arith.constant 0 : index
    %c0_26 = arith.constant 0 : index
    %41 = vector.load %arg2[%c6, %c0_25, %c0_26] : memref<7x8x8xf32, #tpu.memory_space<vmem>>, vector<1x8x8xf32>
    %42 = vector.shape_cast %41 : vector<1x8x8xf32> to vector<8x8xf32>
    %cst_27 = arith.constant dense<0.000000e+00> : vector<8x128xf32>
    %43 = tpu.matmul %42, %40, %cst_27 {dimension_numbers = #tpu.dot_dimension_numbers<[1], [0], [0], [1], [0, 0, 1, 1], [], []>} : vector<8x8xf32>, vector<8x128xf32>, vector<8x128xf32> -> vector<8x128xf32>
    %44 = arith.addf %39, %43 : vector<8x128xf32>
    %45 = vector.broadcast %3 : vector<8x1xf32> to vector<8x128xf32>
    %46 = arith.addf %44, %45 : vector<8x128xf32>
    %cst_28 = arith.constant 0.000000e+00 : f32
    %47 = vector.broadcast %cst_28 : f32 to vector<8x128xf32>
    %48 = arith.maximumf %46, %47 : vector<8x128xf32>
    %cst_29 = arith.constant 0.000000e+00 : f32
    %49 = vector.shape_cast %2 : vector<1x128xi1> to vector<1x128xi1>
    %50 = vector.broadcast %49 : vector<1x128xi1> to vector<8x128xi1>
    %51 = vector.broadcast %cst_29 : f32 to vector<8x128xf32>
    %52 = arith.select %50, %48, %51 : vector<8x128xi1>, vector<8x128xf32>
    %cst_30 = arith.constant 0.000000e+00 : f32
    %53 = vector.broadcast %cst_30 : f32 to vector<8x128xf32>
    %c3_i32_31 = arith.constant 3 : i32
    %54 = tpu.dynamic_rotate %52 by %c3_i32_31 dim 1 : vector<8x128xf32>, i32 -> vector<8x128xf32>
    %c0_32 = arith.constant 0 : index
    %c0_33 = arith.constant 0 : index
    %c0_34 = arith.constant 0 : index
    %55 = vector.load %arg4[%c0_32, %c0_33, %c0_34] : memref<7x8x8xf32, #tpu.memory_space<vmem>>, vector<1x8x8xf32>
    %56 = vector.shape_cast %55 : vector<1x8x8xf32> to vector<8x8xf32>
    %cst_35 = arith.constant dense<0.000000e+00> : vector<8x128xf32>
    %57 = tpu.matmul %56, %54, %cst_35 {dimension_numbers = #tpu.dot_dimension_numbers<[1], [0], [0], [1], [0, 0, 1, 1], [], []>} : vector<8x8xf32>, vector<8x128xf32>, vector<8x128xf32> -> vector<8x128xf32>
    %58 = arith.addf %53, %57 : vector<8x128xf32>
    %c2_i32_36 = arith.constant 2 : i32
    %59 = tpu.dynamic_rotate %52 by %c2_i32_36 dim 1 : vector<8x128xf32>, i32 -> vector<8x128xf32>
    %c1_37 = arith.constant 1 : index
    %c0_38 = arith.constant 0 : index
    %c0_39 = arith.constant 0 : index
    %60 = vector.load %arg4[%c1_37, %c0_38, %c0_39] : memref<7x8x8xf32, #tpu.memory_space<vmem>>, vector<1x8x8xf32>
    %61 = vector.shape_cast %60 : vector<1x8x8xf32> to vector<8x8xf32>
    %cst_40 = arith.constant dense<0.000000e+00> : vector<8x128xf32>
    %62 = tpu.matmul %61, %59, %cst_40 {dimension_numbers = #tpu.dot_dimension_numbers<[1], [0], [0], [1], [0, 0, 1, 1], [], []>} : vector<8x8xf32>, vector<8x128xf32>, vector<8x128xf32> -> vector<8x128xf32>
    %63 = arith.addf %58, %62 : vector<8x128xf32>
    %c1_i32_41 = arith.constant 1 : i32
    %64 = tpu.dynamic_rotate %52 by %c1_i32_41 dim 1 : vector<8x128xf32>, i32 -> vector<8x128xf32>
    %c2_42 = arith.constant 2 : index
    %c0_43 = arith.constant 0 : index
    %c0_44 = arith.constant 0 : index
    %65 = vector.load %arg4[%c2_42, %c0_43, %c0_44] : memref<7x8x8xf32, #tpu.memory_space<vmem>>, vector<1x8x8xf32>
    %66 = vector.shape_cast %65 : vector<1x8x8xf32> to vector<8x8xf32>
    %cst_45 = arith.constant dense<0.000000e+00> : vector<8x128xf32>
    %67 = tpu.matmul %66, %64, %cst_45 {dimension_numbers = #tpu.dot_dimension_numbers<[1], [0], [0], [1], [0, 0, 1, 1], [], []>} : vector<8x8xf32>, vector<8x128xf32>, vector<8x128xf32> -> vector<8x128xf32>
    %68 = arith.addf %63, %67 : vector<8x128xf32>
    %c3_46 = arith.constant 3 : index
    %c0_47 = arith.constant 0 : index
    %c0_48 = arith.constant 0 : index
    %69 = vector.load %arg4[%c3_46, %c0_47, %c0_48] : memref<7x8x8xf32, #tpu.memory_space<vmem>>, vector<1x8x8xf32>
    %70 = vector.shape_cast %69 : vector<1x8x8xf32> to vector<8x8xf32>
    %cst_49 = arith.constant dense<0.000000e+00> : vector<8x128xf32>
    %71 = tpu.matmul %70, %52, %cst_49 {dimension_numbers = #tpu.dot_dimension_numbers<[1], [0], [0], [1], [0, 0, 1, 1], [], []>} : vector<8x8xf32>, vector<8x128xf32>, vector<8x128xf32> -> vector<8x128xf32>
    %72 = arith.addf %68, %71 : vector<8x128xf32>
    %c127_i32_50 = arith.constant 127 : i32
    %73 = tpu.dynamic_rotate %52 by %c127_i32_50 dim 1 : vector<8x128xf32>, i32 -> vector<8x128xf32>
    %c4_51 = arith.constant 4 : index
    %c0_52 = arith.constant 0 : index
    %c0_53 = arith.constant 0 : index
    %74 = vector.load %arg4[%c4_51, %c0_52, %c0_53] : memref<7x8x8xf32, #tpu.memory_space<vmem>>, vector<1x8x8xf32>
    %75 = vector.shape_cast %74 : vector<1x8x8xf32> to vector<8x8xf32>
    %cst_54 = arith.constant dense<0.000000e+00> : vector<8x128xf32>
    %76 = tpu.matmul %75, %73, %cst_54 {dimension_numbers = #tpu.dot_dimension_numbers<[1], [0], [0], [1], [0, 0, 1, 1], [], []>} : vector<8x8xf32>, vector<8x128xf32>, vector<8x128xf32> -> vector<8x128xf32>
    %77 = arith.addf %72, %76 : vector<8x128xf32>
    %c126_i32_55 = arith.constant 126 : i32
    %78 = tpu.dynamic_rotate %52 by %c126_i32_55 dim 1 : vector<8x128xf32>, i32 -> vector<8x128xf32>
    %c5_56 = arith.constant 5 : index
    %c0_57 = arith.constant 0 : index
    %c0_58 = arith.constant 0 : index
    %79 = vector.load %arg4[%c5_56, %c0_57, %c0_58] : memref<7x8x8xf32, #tpu.memory_space<vmem>>, vector<1x8x8xf32>
    %80 = vector.shape_cast %79 : vector<1x8x8xf32> to vector<8x8xf32>
    %cst_59 = arith.constant dense<0.000000e+00> : vector<8x128xf32>
    %81 = tpu.matmul %80, %78, %cst_59 {dimension_numbers = #tpu.dot_dimension_numbers<[1], [0], [0], [1], [0, 0, 1, 1], [], []>} : vector<8x8xf32>, vector<8x128xf32>, vector<8x128xf32> -> vector<8x128xf32>
    %82 = arith.addf %77, %81 : vector<8x128xf32>
    %c125_i32_60 = arith.constant 125 : i32
    %83 = tpu.dynamic_rotate %52 by %c125_i32_60 dim 1 : vector<8x128xf32>, i32 -> vector<8x128xf32>
    %c6_61 = arith.constant 6 : index
    %c0_62 = arith.constant 0 : index
    %c0_63 = arith.constant 0 : index
    %84 = vector.load %arg4[%c6_61, %c0_62, %c0_63] : memref<7x8x8xf32, #tpu.memory_space<vmem>>, vector<1x8x8xf32>
    %85 = vector.shape_cast %84 : vector<1x8x8xf32> to vector<8x8xf32>
    %cst_64 = arith.constant dense<0.000000e+00> : vector<8x128xf32>
    %86 = tpu.matmul %85, %83, %cst_64 {dimension_numbers = #tpu.dot_dimension_numbers<[1], [0], [0], [1], [0, 0, 1, 1], [], []>} : vector<8x8xf32>, vector<8x128xf32>, vector<8x128xf32> -> vector<8x128xf32>
    %87 = arith.addf %82, %86 : vector<8x128xf32>
    %88 = vector.broadcast %4 : vector<8x1xf32> to vector<8x128xf32>
    %89 = arith.addf %87, %88 : vector<8x128xf32>
    %90 = arith.addf %89, %9 : vector<8x128xf32>
    %cst_65 = arith.constant 0.000000e+00 : f32
    %91 = vector.broadcast %cst_65 : f32 to vector<8x128xf32>
    %92 = arith.maximumf %90, %91 : vector<8x128xf32>
    %93 = arith.index_cast %c0_i32 : i32 to index
    %c0_66 = arith.constant 0 : index
    %c0_67 = arith.constant 0 : index
    %94 = vector.load %arg6[%93, %c0_66, %c0_67] : memref<1x8x128xf32, #tpu.memory_space<vmem>>, vector<1x8x128xf32>
    %95 = vector.shape_cast %94 : vector<1x8x128xf32> to vector<8x128xf32>
    %96 = vector.shape_cast %92 : vector<8x128xf32> to vector<1x8x128xf32>
    tpu.vector_store %arg6[%93, %c0_66, %c0_67], %96 {strides = array<i32>} : memref<1x8x128xf32, #tpu.memory_space<vmem>>, vector<1x8x128xf32>,
    %c1_i32_68 = arith.constant 1 : i32
    return
  }
  func.func @transform_0(%arg0: i32) -> (i32, i32, i32) {
    %c0_i32 = arith.constant 0 : i32
    %c0_i32_0 = arith.constant 0 : i32
    %c0_i32_1 = arith.constant 0 : i32
    return %arg0, %c0_i32, %c0_i32_0 : i32, i32, i32
  }
  func.func @transform_1(%arg0: i32) -> (i32, i32, i32) {
    %c0_i32 = arith.constant 0 : i32
    %c0_i32_0 = arith.constant 0 : i32
    %c0_i32_1 = arith.constant 0 : i32
    %c0_i32_2 = arith.constant 0 : i32
    return %c0_i32, %c0_i32_0, %c0_i32_1 : i32, i32, i32
  }
  func.func @transform_2(%arg0: i32) -> (i32, i32) {
    %c0_i32 = arith.constant 0 : i32
    %c0_i32_0 = arith.constant 0 : i32
    %c0_i32_1 = arith.constant 0 : i32
    return %c0_i32, %c0_i32_0 : i32, i32
  }
  func.func @transform_3(%arg0: i32) -> (i32, i32, i32) {
    %c0_i32 = arith.constant 0 : i32
    %c0_i32_0 = arith.constant 0 : i32
    %c0_i32_1 = arith.constant 0 : i32
    %c0_i32_2 = arith.constant 0 : i32
    return %c0_i32, %c0_i32_0, %c0_i32_1 : i32, i32, i32
  }
  func.func @transform_4(%arg0: i32) -> (i32, i32) {
    %c0_i32 = arith.constant 0 : i32
    %c0_i32_0 = arith.constant 0 : i32
    %c0_i32_1 = arith.constant 0 : i32
    return %c0_i32, %c0_i32_0 : i32, i32
  }
  func.func @transform_5(%arg0: i32) -> (i32, i32, i32) {
    %c0_i32 = arith.constant 0 : i32
    %c0_i32_0 = arith.constant 0 : i32
    %c0_i32_1 = arith.constant 0 : i32
    return %arg0, %c0_i32, %c0_i32_0 : i32, i32, i32
  }
}

</mosaic_0001>

<llo_original>
// kernel: tpu_custom_call.1
$region0: #{tpu_custom_call.1}
  #allocation0 [shape = 'u32[]', space=smem, size = 0x4, offset = 0x4, fixed_abs, tag = 'smem constant byte address 0x4 - core index']
  #allocation1 [shape = 'u32[144,128]{1,0:T(1,128)}', space=vmem, size = 0x12000, scoped, tag = 'internal scratch']
  %s0 = inlined_call_operand.vmem [shape: f32[2,8,16], index: 0, kind: input, shape index: {}]
  %s1 = inlined_call_operand.hbm [shape: f32[7,8,8], index: 1, kind: input, shape index: {}]
  %s2 = inlined_call_operand.vmem [shape: f32[8,1], index: 2, kind: input, shape index: {}]
  %s3 = inlined_call_operand.hbm [shape: f32[7,8,8], index: 3, kind: input, shape index: {}]
  %s4 = inlined_call_operand.vmem [shape: f32[8,1], index: 4, kind: input, shape index: {}]
  %s5 = inlined_call_operand.hbm [shape: f32[2,8,128], index: 5, kind: output, shape index: {}]
  %s6 = sld [smem:[#allocation0]]
  $region61: #{tpu_custom_call.1} parent=0
    _
  %s8 = ssub.s32 1, %s6
  %s9 = scalar_select 0, %s8, %s6
  $region1: #{tpu_custom_call.1} parent=0
    #allocation2 [shape = 'u8[28672]{0}', space=vmem, size = 0x7000, scoped, tag = 'input window, operand 1, single buffered']
    #allocation3 [shape = 's32[2]{0}', space=sflag, size = 0x8, scoped, tag = 'scoped memory for tpu_custom_call.1']
    #allocation4 [shape = 's32[2]{0}', space=sflag, size = 0x8, scoped, tag = 'scoped memory for tpu_custom_call.1']
    #allocation5 [shape = 'u8[28672]{0}', space=vmem, size = 0x7000, scoped, tag = 'input window, operand 3, single buffered']
    #allocation6 [shape = 's32[1]{0}', space=sflag, size = 0x4, scoped, tag = 'scoped memory for tpu_custom_call.1']
    #allocation7 [shape = 'u8[8192]{0}', space=vmem, size = 0x2000, scoped, tag = 'output window, operand 0']
    %10 = vsyncpa [#allocation3], 0
    %11 = vsyncpa [#allocation6], 0
    %12 = vsyncpa [#allocation4], 0
    %s13 = scalar_lea.sflag [#allocation4], 1
    %14 = vsyncpa %s13, 0
    loop: start=0, step=1, limit=4
    $region2: #{tpu_custom_call.1} parent=1 // loop_pre_header
      _
    $region3: #{tpu_custom_call.1} parent=1 // loop_header
      %s16 = sphi 0, %s20
      %p17 = scmp.ge.s32.totalorder %s16, 4
      %s26 = sphi 0, %s28
      %s29 = sphi 0, %s26
      %s30 = sphi 0, %s29
      %s46 = sphi 0, %s30
      %s50 = sphi 0, %s50
      %s52 = sphi 0, %s50
      %s53 = sphi 0, %s52
      %s67 = sphi 0, %s53
      %s71 = sphi 0, %s71
      %s73 = sphi 0, %s71
      %s74 = sphi 0, %s73
      %s88 = sphi 0, %s74
      %s92 = sphi 0, %s92
      %s94 = sphi 0, %s92
      %s95 = sphi 0, %s94
      %s109 = sphi 0, %s95
      %s113 = sphi 0, %s113
      %s115 = sphi 0, %s113
      %s116 = sphi 0, %s115
      %s130 = sphi 0, %s116
      %s136 = sphi 0, %s138
      %s139 = sphi 0, %s136
      %s140 = sphi 0, %s139
      %s156 = sphi 0, %s140
    $region4: #{tpu_custom_call.1} parent=1 // loop_header_branch
      %19 = sbr.rel (%p17) target = $region8
    $region5: #{tpu_custom_call.1} parent=1 // loop_body
      %s21 = ssub.s32 %s16, 1
      %s22 = ssub.s32 %s16, 2
      %s23 = sadd.s32 %s16, 1
      %s24 = ssub.s32 %s16, %s23
      %p25 = scmp.eq.s32.totalorder %s24, 0
      %s27 = sadd.s32 %s26, 1
      %s28 = scalar_select %p25, %s26, %s27
      %p31 = pneg %p25
      %p32 = scmp.eq.s32.totalorder %s16, 1
      %p33 = por %p31, %p32
      %p34 = scmp.ne.s32.totalorder %s26, %s29
      %p35 = scmp.eq.s32.totalorder %s16, 0
      %p36 = por %p34, %p35
      %p37 = scmp.ne.s32.totalorder %s26, %s29
      %p38 = scmp.eq.s32.totalorder %s21, 1
      %p39 = por %p37, %p38
      %p40 = scmp.ne.s32.totalorder %s29, %s30
      %p41 = scmp.eq.s32.totalorder %s21, 0
      %p42 = por %p40, %p41
      %p43 = scmp.ne.s32.totalorder %s29, %s30
      %p44 = scmp.eq.s32.totalorder %s22, 1
      %p45 = por %p43, %p44
      %p47 = scmp.ne.s32.totalorder %s30, %s46
      %p48 = scmp.eq.s32.totalorder %s22, 0
      %p49 = por %p47, %p48
      %s51 = sadd.s32 %s50, 1
      %p54 = scmp.eq.s32.totalorder %s16, 1
      %p55 = scmp.ne.s32.totalorder %s50, %s52
      %p56 = scmp.eq.s32.totalorder %s16, 0
      %p57 = por %p55, %p56
      %p58 = scmp.ne.s32.totalorder %s50, %s52
      %p59 = scmp.eq.s32.totalorder %s21, 1
      %p60 = por %p58, %p59
      %p61 = scmp.ne.s32.totalorder %s52, %s53
      %p62 = scmp.eq.s32.totalorder %s21, 0
      %p63 = por %p61, %p62
      %p64 = scmp.ne.s32.totalorder %s52, %s53
      %p65 = scmp.eq.s32.totalorder %s22, 1
      %p66 = por %p64, %p65
      %p68 = scmp.ne.s32.totalorder %s53, %s67
      %p69 = scmp.eq.s32.totalorder %s22, 0
      %p70 = por %p68, %p69
      %s72 = sadd.s32 %s71, 1
      %p75 = scmp.eq.s32.totalorder %s16, 1
      %p76 = scmp.ne.s32.totalorder %s71, %s73
      %p77 = scmp.eq.s32.totalorder %s16, 0
      %p78 = por %p76, %p77
      %p79 = scmp.ne.s32.totalorder %s71, %s73
      %p80 = scmp.eq.s32.totalorder %s21, 1
      %p81 = por %p79, %p80
      %p82 = scmp.ne.s32.totalorder %s73, %s74
      %p83 = scmp.eq.s32.totalorder %s21, 0
      %p84 = por %p82, %p83
      %p85 = scmp.ne.s32.totalorder %s73, %s74
      %p86 = scmp.eq.s32.totalorder %s22, 1
      %p87 = por %p85, %p86
      %p89 = scmp.ne.s32.totalorder %s74, %s88
      %p90 = scmp.eq.s32.totalorder %s22, 0
      %p91 = por %p89, %p90
      %s93 = sadd.s32 %s92, 1
      %p96 = scmp.eq.s32.totalorder %s16, 1
      %p97 = scmp.ne.s32.totalorder %s92, %s94
      %p98 = scmp.eq.s32.totalorder %s16, 0
      %p99 = por %p97, %p98
      %p100 = scmp.ne.s32.totalorder %s92, %s94
      %p101 = scmp.eq.s32.totalorder %s21, 1
      %p102 = por %p100, %p101
      %p103 = scmp.ne.s32.totalorder %s94, %s95
      %p104 = scmp.eq.s32.totalorder %s21, 0
      %p105 = por %p103, %p104
      %p106 = scmp.ne.s32.totalorder %s94, %s95
      %p107 = scmp.eq.s32.totalorder %s22, 1
      %p108 = por %p106, %p107
      %p110 = scmp.ne.s32.totalorder %s95, %s109
      %p111 = scmp.eq.s32.totalorder %s22, 0
      %p112 = por %p110, %p111
      %s114 = sadd.s32 %s113, 1
      %p117 = scmp.eq.s32.totalorder %s16, 1
      %p118 = scmp.ne.s32.totalorder %s113, %s115
      %p119 = scmp.eq.s32.totalorder %s16, 0
      %p120 = por %p118, %p119
      %p121 = scmp.ne.s32.totalorder %s113, %s115
      %p122 = scmp.eq.s32.totalorder %s21, 1
      %p123 = por %p121, %p122
      %p124 = scmp.ne.s32.totalorder %s115, %s116
      %p125 = scmp.eq.s32.totalorder %s21, 0
      %p126 = por %p124, %p125
      %p127 = scmp.ne.s32.totalorder %s115, %s116
      %p128 = scmp.eq.s32.totalorder %s22, 1
      %p129 = por %p127, %p128
      %p131 = scmp.ne.s32.totalorder %s116, %s130
      %p132 = scmp.eq.s32.totalorder %s22, 0
      %p133 = por %p131, %p132
      %s134 = ssub.s32 %s16, %s23
      %p135 = scmp.eq.s32.totalorder %s134, 0
      %s137 = sadd.s32 %s136, 1
      %s138 = scalar_select %p135, %s136, %s137
      %p141 = pneg %p135
      %p142 = scmp.eq.s32.totalorder %s16, 1
      %p143 = por %p141, %p142
      %p144 = scmp.ne.s32.totalorder %s136, %s139
      %p145 = scmp.eq.s32.totalorder %s16, 0
      %p146 = por %p144, %p145
      %p147 = scmp.ne.s32.totalorder %s136, %s139
      %p148 = scmp.eq.s32.totalorder %s21, 1
      %p149 = por %p147, %p148
      %p150 = scmp.ne.s32.totalorder %s139, %s140
      %p151 = scmp.eq.s32.totalorder %s21, 0
      %p152 = por %p150, %p151
      %p153 = scmp.ne.s32.totalorder %s139, %s140
      %p154 = scmp.eq.s32.totalorder %s22, 1
      %p155 = por %p153, %p154
      %p157 = scmp.ne.s32.totalorder %s140, %s156
      %p158 = scmp.eq.s32.totalorder %s22, 0
      %p159 = por %p157, %p158
      %p160 = scmp.le.s32.totalorder 1, %s16
      %p161 = scmp.lt.s32.totalorder %s16, 3
      %p162 = pnand %p160, %p161
      %p163 = pneg %p162
      // Predicated region
      $region9: #{tpu_custom_call.1} parent=5 // pred_check
        _
      $region10: #{tpu_custom_call.1} parent=5 // pred_check_branch
        %165 = sbr.rel (%p162) target = $region12
      $region11: #{tpu_custom_call.1} parent=5 // pred_region
        %s166 = ssub.s32 %s16, 1
        // Predicated region
        $region13: #{tpu_custom_call.1} parent=11 // pred_check
          %p167 = pneg %p63
        $region14: #{tpu_custom_call.1} parent=11 // pred_check_branch
          %169 = sbr.rel (%p167) target = $region16
        $region15: #{tpu_custom_call.1} parent=11 // pred_region
          %s171 = ssub.s32 896, 896
          %172 = vsyncadd [#allocation3], %s171
          %s173 = sshll.u32 [#allocation2], 4
          %s174 = int_to_ptr.vmem [resolvable:$true] %s173
          %179 = dma.hbm_to_vmem [thread:$0]  %s1, 896, %s174, [#allocation3], 128, 128, 8
        $region16: #{tpu_custom_call.1} parent=11 // pred_fallthru
          _
        // Predicated region
        $region17: #{tpu_custom_call.1} parent=11 // pred_check
          %p180 = pneg %p84
        $region18: #{tpu_custom_call.1} parent=11 // pred_check_branch
          %182 = sbr.rel (%p180) target = $region20
        $region19: #{tpu_custom_call.1} parent=11 // pred_region
          _
        $region20: #{tpu_custom_call.1} parent=11 // pred_fallthru
          _
        // Predicated region
        $region21: #{tpu_custom_call.1} parent=11 // pred_check
          %p183 = pneg %p105
        $region22: #{tpu_custom_call.1} parent=11 // pred_check_branch
          %185 = sbr.rel (%p183) target = $region24
        $region23: #{tpu_custom_call.1} parent=11 // pred_region
          %s187 = ssub.s32 896, 896
          %188 = vsyncadd [#allocation6], %s187
          %s189 = sshll.u32 [#allocation5], 4
          %s190 = int_to_ptr.vmem [resolvable:$true] %s189
          %195 = dma.hbm_to_vmem [thread:$0]  %s3, 896, %s190, [#allocation6], 128, 128, 8
        $region24: #{tpu_custom_call.1} parent=11 // pred_fallthru
          _
        // Predicated region
        $region25: #{tpu_custom_call.1} parent=11 // pred_check
          %p196 = pneg %p126
        $region26: #{tpu_custom_call.1} parent=11 // pred_check_branch
          %198 = sbr.rel (%p196) target = $region28
        $region27: #{tpu_custom_call.1} parent=11 // pred_region
          _
        $region28: #{tpu_custom_call.1} parent=11 // pred_fallthru
          _
      $region12: #{tpu_custom_call.1} parent=5 // pred_fallthru
        _
      %p199 = scmp.lt.s32.totalorder %s16, 2
      // Predicated region
      $region29: #{tpu_custom_call.1} parent=5 // pred_check
        %p200 = pneg %p199
      $region30: #{tpu_custom_call.1} parent=5 // pred_check_branch
        %202 = sbr.rel (%p200) target = $region32
      $region31: #{tpu_custom_call.1} parent=5 // pred_region
        // Predicated region
        $region33: #{tpu_custom_call.1} parent=31 // pred_check
          %p203 = pneg %p36
        $region34: #{tpu_custom_call.1} parent=31 // pred_check_branch
          %205 = sbr.rel (%p203) target = $region36
        $region35: #{tpu_custom_call.1} parent=31 // pred_region
          %p206 = scmp.lt.s32.totalorder %s16, 1
          %s207 = scalar_select %p206, %s16, 1
          %s208 = smul.addr %s207, 8
          %s209 = scalar_lea.vmem %s0, %s208
        $region36: #{tpu_custom_call.1} parent=31 // pred_fallthru
          _
      $region32: #{tpu_custom_call.1} parent=5 // pred_fallthru
        _
      %p210 = scmp.le.s32.totalorder 1, %s16
      %p211 = scmp.lt.s32.totalorder %s16, 3
      %p212 = pnand %p210, %p211
      %p213 = pneg %p212
      // Predicated region
      $region37: #{tpu_custom_call.1} parent=5 // pred_check
        _
      $region38: #{tpu_custom_call.1} parent=5 // pred_check_branch
        %215 = sbr.rel (%p212) target = $region40
      $region39: #{tpu_custom_call.1} parent=5 // pred_region
        %s216 = ssub.s32 %s16, 1
        // Predicated region
        $region41: #{tpu_custom_call.1} parent=39 // pred_check
          %p217 = pneg %p63
        $region42: #{tpu_custom_call.1} parent=39 // pred_check_branch
          %219 = sbr.rel (%p217) target = $region44
        $region43: #{tpu_custom_call.1} parent=39 // pred_region
          %220 = dma.done [#allocation3], 896
        $region44: #{tpu_custom_call.1} parent=39 // pred_fallthru
          _
        // Predicated region
        $region45: #{tpu_custom_call.1} parent=39 // pred_check
          %p221 = pneg %p105
        $region46: #{tpu_custom_call.1} parent=39 // pred_check_branch
          %223 = sbr.rel (%p221) target = $region48
        $region47: #{tpu_custom_call.1} parent=39 // pred_region
          %224 = dma.done [#allocation6], 896
        $region48: #{tpu_custom_call.1} parent=39 // pred_fallthru
          _
        %p225 = scmp.lt.s32.totalorder %s21, 1
        %s226 = scalar_select %p225, %s21, 1
        %s227 = smul.addr %s226, 8
        %s228 = scalar_lea.vmem %s0, %s227
        %p229 = pneg %p42
        %p230 = pneg %p39
        %p231 = pneg %p63
        %p232 = pneg %p60
        %p233 = pneg %p84
        %p234 = pneg %p81
        %p235 = pneg %p105
        %p236 = pneg %p102
        %p237 = pneg %p126
        %p238 = pneg %p123
        %p239 = pneg %p152
        %p240 = pneg %p149
        %s241 = sand.u32 %s139, 1
        %s242 = scalar_lea.sflag [#allocation4], %s241
        %s243 = sand.u32 %s139, 1
        %s244 = smul.addr %s243, 8
        %s245 = scalar_lea.vmem [#allocation7], %s244
        %p246 = scmp.lt.s32.totalorder %s21, 1
        %s247 = scalar_select %p246, %s21, 1
        %s248 = smul.addr %s247, 8
        %s249 = scalar_lea.vmem %s0, %s248
        %v250 = vlaneseq
        %v251 = vand.u32 %v250, 127
        %vm252 = vcmp.lt.s32.totalorder %v251, 16
        %v253 = vld [vmem:[%s2] sm:$0xff]
        %v254 = vld [vmem:[%s4] sm:$0xff]
        %v255 = vld [vmem:[%s249] sm:$0xff]
        %vm256 = vcmask 130048
        %v257 = vsel %vm256, %v255, 0.0
        %258 = vrot.lane.b32.xlu0 %v257, 3
        %v259 = vpop.permute.xlu0 %258
        %v260 = vld [vmem:[#allocation2] sm:$0xff]
        %261 = vrot.lane.b32.xlu0 %v257, 2
        %v262 = vpop.permute.xlu0 %261
        %s263 = scalar_lea.vmem [#allocation2], 8
        %v264 = vld [vmem:[%s263] sm:$0xff]
        %vm265 = vcmask 64512
        %v267 = vsel %vm265, %v264, 0
        %269 = vmatprep.subr.mxu0 0.0
        %270 = vmatpush1.msra.mxu0 0.0
        %271 = vmatprep.subr.mxu0 0.0
        %272 = vmatpush1.msra.mxu0 0.0
        %273 = vmatprep.subr.mxu0 0.0
        %274 = vmatpush1.msra.mxu0 0.0
        %275 = vmatprep.subr.mxu0 0.0
        %276 = vmatpush1.msra.mxu0 0.0
        %277 = vmatprep.subr.mxu0 0.0
        %278 = vmatpush1.msra.mxu0 0.0
        %279 = vmatprep.subr.mxu0 0.0
        %280 = vmatpush1.msra.mxu0 0.0
        %281 = vmatprep.subr.mxu0 0.0
        %282 = vmatpush1.msra.mxu0 0.0
        %283 = vmatprep.subr.mxu0 0.0
        %284 = vmatpush1.msra.mxu0 0.0
        %285 = vmatprep.subr.mxu0 0.0
        %286 = vmatpush1.msra.mxu0 0.0
        %287 = vmatprep.subr.mxu0 0.0
        %288 = vmatpush1.msra.mxu0 0.0
        %289 = vmatprep.subr.mxu0 0.0
        %290 = vmatpush1.msra.mxu0 0.0
        %291 = vmatprep.subr.mxu0 0.0
        %292 = vmatpush1.msra.mxu0 0.0
        %293 = vmatprep.subr.mxu0 0.0
        %294 = vmatpush1.msra.mxu0 0.0
        %295 = vmatprep.subr.mxu0 0.0
        %296 = vmatpush1.msra.mxu0 0.0
        %297 = vmatprep.subr.mxu0 0.0
        %298 = vmatpush1.msra.mxu0 0.0
        %299 = vmatprep.subr.mxu0 0.0
        %300 = vmatpush1.msra.mxu0 %v262
        %301 = vmatprep.subr.mxu0 0.0
        %302 = vmatpush2.msra.mxu0 0.0
        %303 = vmatprep.subr.mxu0 0.0
        %304 = vmatpush2.msra.mxu0 0.0
        %305 = vmatprep.subr.mxu0 0.0
        %306 = vmatpush2.msra.mxu0 0.0
        %307 = vmatprep.subr.mxu0 0.0
        %308 = vmatpush2.msra.mxu0 0.0
        %309 = vmatprep.subr.mxu0 0.0
        %310 = vmatpush2.msra.mxu0 0.0
        %311 = vmatprep.subr.mxu0 0.0
        %312 = vmatpush2.msra.mxu0 0.0
        %313 = vmatprep.subr.mxu0 0.0
        %314 = vmatpush2.msra.mxu0 0.0
        %315 = vmatprep.subr.mxu0 0.0
        %316 = vmatpush2.msra.mxu0 0.0
        %317 = vmatprep.subr.mxu0 0.0
        %318 = vmatpush2.msra.mxu0 0.0
        %319 = vmatprep.subr.mxu0 0.0
        %320 = vmatpush2.msra.mxu0 0.0
        %321 = vmatprep.subr.mxu0 0.0
        %322 = vmatpush2.msra.mxu0 0.0
        %323 = vmatprep.subr.mxu0 0.0
        %324 = vmatpush2.msra.mxu0 0.0
        %325 = vmatprep.subr.mxu0 0.0
        %326 = vmatpush2.msra.mxu0 0.0
        %327 = vmatprep.subr.mxu0 0.0
        %328 = vmatpush2.msra.mxu0 0.0
        %329 = vmatprep.subr.mxu0 0.0
        %330 = vmatpush2.msra.mxu0 0.0
        %331 = vmatprep.subr.mxu0 0.0
        %332 = vmatpush2.msra.mxu0 0.0
        %333 = vmatprep.mubr.f32.mxu0 0.0
        %334 = vmatmul.mubr.f32.gmra.mxu0 %v267
        %v335 = vpop.f32.mrf.mxu0
        %v336 = vadd.f32 0.0, %v335
        %v337 = vpop.f32.mrf.mxu0
        %338 = vdwg.mxu0
        %v340 = vsel %vm265, %v260, 0
        %342 = vmatprep.subr.mxu0 0.0
        %343 = vmatpush1.msra.mxu0 0.0
        %344 = vmatprep.subr.mxu0 0.0
        %345 = vmatpush1.msra.mxu0 0.0
        %346 = vmatprep.subr.mxu0 0.0
        %347 = vmatpush1.msra.mxu0 0.0
        %348 = vmatprep.subr.mxu0 0.0
        %349 = vmatpush1.msra.mxu0 0.0
        %350 = vmatprep.subr.mxu0 0.0
        %351 = vmatpush1.msra.mxu0 0.0
        %352 = vmatprep.subr.mxu0 0.0
        %353 = vmatpush1.msra.mxu0 0.0
        %354 = vmatprep.subr.mxu0 0.0
        %355 = vmatpush1.msra.mxu0 0.0
        %356 = vmatprep.subr.mxu0 0.0
        %357 = vmatpush1.msra.mxu0 0.0
        %358 = vmatprep.subr.mxu0 0.0
        %359 = vmatpush1.msra.mxu0 0.0
        %360 = vmatprep.subr.mxu0 0.0
        %361 = vmatpush1.msra.mxu0 0.0
        %362 = vmatprep.subr.mxu0 0.0
        %363 = vmatpush1.msra.mxu0 0.0
        %364 = vmatprep.subr.mxu0 0.0
        %365 = vmatpush1.msra.mxu0 0.0
        %366 = vmatprep.subr.mxu0 0.0
        %367 = vmatpush1.msra.mxu0 0.0
        %368 = vmatprep.subr.mxu0 0.0
        %369 = vmatpush1.msra.mxu0 0.0
        %370 = vmatprep.subr.mxu0 0.0
        %371 = vmatpush1.msra.mxu0 0.0
        %372 = vmatprep.subr.mxu0 0.0
        %373 = vmatpush1.msra.mxu0 %v259
        %374 = vmatprep.subr.mxu0 0.0
        %375 = vmatpush2.msra.mxu0 0.0
        %376 = vmatprep.subr.mxu0 0.0
        %377 = vmatpush2.msra.mxu0 0.0
        %378 = vmatprep.subr.mxu0 0.0
        %379 = vmatpush2.msra.mxu0 0.0
        %380 = vmatprep.subr.mxu0 0.0
        %381 = vmatpush2.msra.mxu0 0.0
        %382 = vmatprep.subr.mxu0 0.0
        %383 = vmatpush2.msra.mxu0 0.0
        %384 = vmatprep.subr.mxu0 0.0
        %385 = vmatpush2.msra.mxu0 0.0
        %386 = vmatprep.subr.mxu0 0.0
        %387 = vmatpush2.msra.mxu0 0.0
        %388 = vmatprep.subr.mxu0 0.0
        %389 = vmatpush2.msra.mxu0 0.0
        %390 = vmatprep.subr.mxu0 0.0
        %391 = vmatpush2.msra.mxu0 0.0
        %392 = vmatprep.subr.mxu0 0.0
        %393 = vmatpush2.msra.mxu0 0.0
        %394 = vmatprep.subr.mxu0 0.0
        %395 = vmatpush2.msra.mxu0 0.0
        %396 = vmatprep.subr.mxu0 0.0
        %397 = vmatpush2.msra.mxu0 0.0
        %398 = vmatprep.subr.mxu0 0.0
        %399 = vmatpush2.msra.mxu0 0.0
        %400 = vmatprep.subr.mxu0 0.0
        %401 = vmatpush2.msra.mxu0 0.0
        %402 = vmatprep.subr.mxu0 0.0
        %403 = vmatpush2.msra.mxu0 0.0
        %404 = vmatprep.subr.mxu0 0.0
        %405 = vmatpush2.msra.mxu0 0.0
        %406 = vmatprep.mubr.f32.mxu0 0.0
        %407 = vmatmul.mubr.f32.gmra.mxu0 %v340
        %v408 = vpop.f32.mrf.mxu0
        %v409 = vadd.f32 %v336, %v408
        %v410 = vpop.f32.mrf.mxu0
        %411 = vdwg.mxu0
        %412 = vrot.lane.b32.xlu0 %v257, 1
        %v413 = vpop.permute.xlu0 %412
        %s414 = scalar_lea.vmem [#allocation2], 16
        %v415 = vld [vmem:[%s414] sm:$0xff]
        %v417 = vsel %vm265, %v415, 0
        %419 = vmatprep.subr.mxu0 0.0
        %420 = vmatpush1.msra.mxu0 0.0
        %421 = vmatprep.subr.mxu0 0.0
        %422 = vmatpush1.msra.mxu0 0.0
        %423 = vmatprep.subr.mxu0 0.0
        %424 = vmatpush1.msra.mxu0 0.0
        %425 = vmatprep.subr.mxu0 0.0
        %426 = vmatpush1.msra.mxu0 0.0
        %427 = vmatprep.subr.mxu0 0.0
        %428 = vmatpush1.msra.mxu0 0.0
        %429 = vmatprep.subr.mxu0 0.0
        %430 = vmatpush1.msra.mxu0 0.0
        %431 = vmatprep.subr.mxu0 0.0
        %432 = vmatpush1.msra.mxu0 0.0
        %433 = vmatprep.subr.mxu0 0.0
        %434 = vmatpush1.msra.mxu0 0.0
        %435 = vmatprep.subr.mxu0 0.0
        %436 = vmatpush1.msra.mxu0 0.0
        %437 = vmatprep.subr.mxu0 0.0
        %438 = vmatpush1.msra.mxu0 0.0
        %439 = vmatprep.subr.mxu0 0.0
        %440 = vmatpush1.msra.mxu0 0.0
        %441 = vmatprep.subr.mxu0 0.0
        %442 = vmatpush1.msra.mxu0 0.0
        %443 = vmatprep.subr.mxu0 0.0
        %444 = vmatpush1.msra.mxu0 0.0
        %445 = vmatprep.subr.mxu0 0.0
        %446 = vmatpush1.msra.mxu0 0.0
        %447 = vmatprep.subr.mxu0 0.0
        %448 = vmatpush1.msra.mxu0 0.0
        %449 = vmatprep.subr.mxu0 0.0
        %450 = vmatpush1.msra.mxu0 %v413
        %451 = vmatprep.subr.mxu0 0.0
        %452 = vmatpush2.msra.mxu0 0.0
        %453 = vmatprep.subr.mxu0 0.0
        %454 = vmatpush2.msra.mxu0 0.0
        %455 = vmatprep.subr.mxu0 0.0
        %456 = vmatpush2.msra.mxu0 0.0
        %457 = vmatprep.subr.mxu0 0.0
        %458 = vmatpush2.msra.mxu0 0.0
        %459 = vmatprep.subr.mxu0 0.0
        %460 = vmatpush2.msra.mxu0 0.0
        %461 = vmatprep.subr.mxu0 0.0
        %462 = vmatpush2.msra.mxu0 0.0
        %463 = vmatprep.subr.mxu0 0.0
        %464 = vmatpush2.msra.mxu0 0.0
        %465 = vmatprep.subr.mxu0 0.0
        %466 = vmatpush2.msra.mxu0 0.0
        %467 = vmatprep.subr.mxu0 0.0
        %468 = vmatpush2.msra.mxu0 0.0
        %469 = vmatprep.subr.mxu0 0.0
        %470 = vmatpush2.msra.mxu0 0.0
        %471 = vmatprep.subr.mxu0 0.0
        %472 = vmatpush2.msra.mxu0 0.0
        %473 = vmatprep.subr.mxu0 0.0
        %474 = vmatpush2.msra.mxu0 0.0
        %475 = vmatprep.subr.mxu0 0.0
        %476 = vmatpush2.msra.mxu0 0.0
        %477 = vmatprep.subr.mxu0 0.0
        %478 = vmatpush2.msra.mxu0 0.0
        %479 = vmatprep.subr.mxu0 0.0
        %480 = vmatpush2.msra.mxu0 0.0
        %481 = vmatprep.subr.mxu0 0.0
        %482 = vmatpush2.msra.mxu0 0.0
        %483 = vmatprep.mubr.f32.mxu0 0.0
        %484 = vmatmul.mubr.f32.gmra.mxu0 %v417
        %v485 = vpop.f32.mrf.mxu0
        %v486 = vadd.f32 0.0, %v485
        %v487 = vpop.f32.mrf.mxu0
        %488 = vdwg.mxu0
        %v489 = vadd.f32 %v409, %v486
        %s490 = scalar_lea.vmem [#allocation2], 24
        %v491 = vld [vmem:[%s490] sm:$0xff]
        %v493 = vsel %vm265, %v491, 0
        %495 = vmatprep.subr.mxu0 0.0
        %496 = vmatpush1.msra.mxu0 0.0
        %497 = vmatprep.subr.mxu0 0.0
        %498 = vmatpush1.msra.mxu0 0.0
        %499 = vmatprep.subr.mxu0 0.0
        %500 = vmatpush1.msra.mxu0 0.0
        %501 = vmatprep.subr.mxu0 0.0
        %502 = vmatpush1.msra.mxu0 0.0
        %503 = vmatprep.subr.mxu0 0.0
        %504 = vmatpush1.msra.mxu0 0.0
        %505 = vmatprep.subr.mxu0 0.0
        %506 = vmatpush1.msra.mxu0 0.0
        %507 = vmatprep.subr.mxu0 0.0
        %508 = vmatpush1.msra.mxu0 0.0
        %509 = vmatprep.subr.mxu0 0.0
        %510 = vmatpush1.msra.mxu0 0.0
        %511 = vmatprep.subr.mxu0 0.0
        %512 = vmatpush1.msra.mxu0 0.0
        %513 = vmatprep.subr.mxu0 0.0
        %514 = vmatpush1.msra.mxu0 0.0
        %515 = vmatprep.subr.mxu0 0.0
        %516 = vmatpush1.msra.mxu0 0.0
        %517 = vmatprep.subr.mxu0 0.0
        %518 = vmatpush1.msra.mxu0 0.0
        %519 = vmatprep.subr.mxu0 0.0
        %520 = vmatpush1.msra.mxu0 0.0
        %521 = vmatprep.subr.mxu0 0.0
        %522 = vmatpush1.msra.mxu0 0.0
        %523 = vmatprep.subr.mxu0 0.0
        %524 = vmatpush1.msra.mxu0 0.0
        %525 = vmatprep.subr.mxu0 0.0
        %526 = vmatpush1.msra.mxu0 %v257
        %527 = vmatprep.subr.mxu0 0.0
        %528 = vmatpush2.msra.mxu0 0.0
        %529 = vmatprep.subr.mxu0 0.0
        %530 = vmatpush2.msra.mxu0 0.0
        %531 = vmatprep.subr.mxu0 0.0
        %532 = vmatpush2.msra.mxu0 0.0
        %533 = vmatprep.subr.mxu0 0.0
        %534 = vmatpush2.msra.mxu0 0.0
        %535 = vmatprep.subr.mxu0 0.0
        %536 = vmatpush2.msra.mxu0 0.0
        %537 = vmatprep.subr.mxu0 0.0
        %538 = vmatpush2.msra.mxu0 0.0
        %539 = vmatprep.subr.mxu0 0.0
        %540 = vmatpush2.msra.mxu0 0.0
        %541 = vmatprep.subr.mxu0 0.0
        %542 = vmatpush2.msra.mxu0 0.0
        %543 = vmatprep.subr.mxu0 0.0
        %544 = vmatpush2.msra.mxu0 0.0
        %545 = vmatprep.subr.mxu0 0.0
        %546 = vmatpush2.msra.mxu0 0.0
        %547 = vmatprep.subr.mxu0 0.0
        %548 = vmatpush2.msra.mxu0 0.0
        %549 = vmatprep.subr.mxu0 0.0
        %550 = vmatpush2.msra.mxu0 0.0
        %551 = vmatprep.subr.mxu0 0.0
        %552 = vmatpush2.msra.mxu0 0.0
        %553 = vmatprep.subr.mxu0 0.0
        %554 = vmatpush2.msra.mxu0 0.0
        %555 = vmatprep.subr.mxu0 0.0
        %556 = vmatpush2.msra.mxu0 0.0
        %557 = vmatprep.subr.mxu0 0.0
        %558 = vmatpush2.msra.mxu0 0.0
        %559 = vmatprep.mubr.f32.mxu0 0.0
        %560 = vmatmul.mubr.f32.gmra.mxu0 %v493
        %v561 = vpop.f32.mrf.mxu0
        %v562 = vadd.f32 0.0, %v561
        %v563 = vpop.f32.mrf.mxu0
        %564 = vdwg.mxu0
        %v565 = vadd.f32 %v489, %v562
        %566 = vrot.lane.b32.xlu0 %v257, 127
        %v567 = vpop.permute.xlu0 %566
        %s568 = scalar_lea.vmem [#allocation2], 32
        %v569 = vld [vmem:[%s568] sm:$0xff]
        %v571 = vsel %vm265, %v569, 0
        %573 = vmatprep.subr.mxu0 0.0
        %574 = vmatpush1.msra.mxu0 0.0
        %575 = vmatprep.subr.mxu0 0.0
        %576 = vmatpush1.msra.mxu0 0.0
        %577 = vmatprep.subr.mxu0 0.0
        %578 = vmatpush1.msra.mxu0 0.0
        %579 = vmatprep.subr.mxu0 0.0
        %580 = vmatpush1.msra.mxu0 0.0
        %581 = vmatprep.subr.mxu0 0.0
        %582 = vmatpush1.msra.mxu0 0.0
        %583 = vmatprep.subr.mxu0 0.0
        %584 = vmatpush1.msra.mxu0 0.0
        %585 = vmatprep.subr.mxu0 0.0
        %586 = vmatpush1.msra.mxu0 0.0
        %587 = vmatprep.subr.mxu0 0.0
        %588 = vmatpush1.msra.mxu0 0.0
        %589 = vmatprep.subr.mxu0 0.0
        %590 = vmatpush1.msra.mxu0 0.0
        %591 = vmatprep.subr.mxu0 0.0
        %592 = vmatpush1.msra.mxu0 0.0
        %593 = vmatprep.subr.mxu0 0.0
        %594 = vmatpush1.msra.mxu0 0.0
        %595 = vmatprep.subr.mxu0 0.0
        %596 = vmatpush1.msra.mxu0 0.0
        %597 = vmatprep.subr.mxu0 0.0
        %598 = vmatpush1.msra.mxu0 0.0
        %599 = vmatprep.subr.mxu0 0.0
        %600 = vmatpush1.msra.mxu0 0.0
        %601 = vmatprep.subr.mxu0 0.0
        %602 = vmatpush1.msra.mxu0 0.0
        %603 = vmatprep.subr.mxu0 0.0
        %604 = vmatpush1.msra.mxu0 %v567
        %605 = vmatprep.subr.mxu0 0.0
        %606 = vmatpush2.msra.mxu0 0.0
        %607 = vmatprep.subr.mxu0 0.0
        %608 = vmatpush2.msra.mxu0 0.0
        %609 = vmatprep.subr.mxu0 0.0
        %610 = vmatpush2.msra.mxu0 0.0
        %611 = vmatprep.subr.mxu0 0.0
        %612 = vmatpush2.msra.mxu0 0.0
        %613 = vmatprep.subr.mxu0 0.0
        %614 = vmatpush2.msra.mxu0 0.0
        %615 = vmatprep.subr.mxu0 0.0
        %616 = vmatpush2.msra.mxu0 0.0
        %617 = vmatprep.subr.mxu0 0.0
        %618 = vmatpush2.msra.mxu0 0.0
        %619 = vmatprep.subr.mxu0 0.0
        %620 = vmatpush2.msra.mxu0 0.0
        %621 = vmatprep.subr.mxu0 0.0
        %622 = vmatpush2.msra.mxu0 0.0
        %623 = vmatprep.subr.mxu0 0.0
        %624 = vmatpush2.msra.mxu0 0.0
        %625 = vmatprep.subr.mxu0 0.0
        %626 = vmatpush2.msra.mxu0 0.0
        %627 = vmatprep.subr.mxu0 0.0
        %628 = vmatpush2.msra.mxu0 0.0
        %629 = vmatprep.subr.mxu0 0.0
        %630 = vmatpush2.msra.mxu0 0.0
        %631 = vmatprep.subr.mxu0 0.0
        %632 = vmatpush2.msra.mxu0 0.0
        %633 = vmatprep.subr.mxu0 0.0
        %634 = vmatpush2.msra.mxu0 0.0
        %635 = vmatprep.subr.mxu0 0.0
        %636 = vmatpush2.msra.mxu0 0.0
        %637 = vmatprep.mubr.f32.mxu0 0.0
        %638 = vmatmul.mubr.f32.gmra.mxu0 %v571
        %v639 = vpop.f32.mrf.mxu0
        %v640 = vadd.f32 0.0, %v639
        %v641 = vpop.f32.mrf.mxu0
        %642 = vdwg.mxu0
        %v643 = vadd.f32 %v565, %v640
        %644 = vrot.lane.b32.xlu0 %v257, 126
        %v645 = vpop.permute.xlu0 %644
        %s646 = scalar_lea.vmem [#allocation2], 40
        %v647 = vld [vmem:[%s646] sm:$0xff]
        %v649 = vsel %vm265, %v647, 0
        %651 = vmatprep.subr.mxu0 0.0
        %652 = vmatpush1.msra.mxu0 0.0
        %653 = vmatprep.subr.mxu0 0.0
        %654 = vmatpush1.msra.mxu0 0.0
        %655 = vmatprep.subr.mxu0 0.0
        %656 = vmatpush1.msra.mxu0 0.0
        %657 = vmatprep.subr.mxu0 0.0
        %658 = vmatpush1.msra.mxu0 0.0
        %659 = vmatprep.subr.mxu0 0.0
        %660 = vmatpush1.msra.mxu0 0.0
        %661 = vmatprep.subr.mxu0 0.0
        %662 = vmatpush1.msra.mxu0 0.0
        %663 = vmatprep.subr.mxu0 0.0
        %664 = vmatpush1.msra.mxu0 0.0
        %665 = vmatprep.subr.mxu0 0.0
        %666 = vmatpush1.msra.mxu0 0.0
        %667 = vmatprep.subr.mxu0 0.0
        %668 = vmatpush1.msra.mxu0 0.0
        %669 = vmatprep.subr.mxu0 0.0
        %670 = vmatpush1.msra.mxu0 0.0
        %671 = vmatprep.subr.mxu0 0.0
        %672 = vmatpush1.msra.mxu0 0.0
        %673 = vmatprep.subr.mxu0 0.0
        %674 = vmatpush1.msra.mxu0 0.0
        %675 = vmatprep.subr.mxu0 0.0
        %676 = vmatpush1.msra.mxu0 0.0
        %677 = vmatprep.subr.mxu0 0.0
        %678 = vmatpush1.msra.mxu0 0.0
        %679 = vmatprep.subr.mxu0 0.0
        %680 = vmatpush1.msra.mxu0 0.0
        %681 = vmatprep.subr.mxu0 0.0
        %682 = vmatpush1.msra.mxu0 %v645
        %683 = vmatprep.subr.mxu0 0.0
        %684 = vmatpush2.msra.mxu0 0.0
        %685 = vmatprep.subr.mxu0 0.0
        %686 = vmatpush2.msra.mxu0 0.0
        %687 = vmatprep.subr.mxu0 0.0
        %688 = vmatpush2.msra.mxu0 0.0
        %689 = vmatprep.subr.mxu0 0.0
        %690 = vmatpush2.msra.mxu0 0.0
        %691 = vmatprep.subr.mxu0 0.0
        %692 = vmatpush2.msra.mxu0 0.0
        %693 = vmatprep.subr.mxu0 0.0
        %694 = vmatpush2.msra.mxu0 0.0
        %695 = vmatprep.subr.mxu0 0.0
        %696 = vmatpush2.msra.mxu0 0.0
        %697 = vmatprep.subr.mxu0 0.0
        %698 = vmatpush2.msra.mxu0 0.0
        %699 = vmatprep.subr.mxu0 0.0
        %700 = vmatpush2.msra.mxu0 0.0
        %701 = vmatprep.subr.mxu0 0.0
        %702 = vmatpush2.msra.mxu0 0.0
        %703 = vmatprep.subr.mxu0 0.0
        %704 = vmatpush2.msra.mxu0 0.0
        %705 = vmatprep.subr.mxu0 0.0
        %706 = vmatpush2.msra.mxu0 0.0
        %707 = vmatprep.subr.mxu0 0.0
        %708 = vmatpush2.msra.mxu0 0.0
        %709 = vmatprep.subr.mxu0 0.0
        %710 = vmatpush2.msra.mxu0 0.0
        %711 = vmatprep.subr.mxu0 0.0
        %712 = vmatpush2.msra.mxu0 0.0
        %713 = vmatprep.subr.mxu0 0.0
        %714 = vmatpush2.msra.mxu0 0.0
        %715 = vmatprep.mubr.f32.mxu0 0.0
        %716 = vmatmul.mubr.f32.gmra.mxu0 %v649
        %v717 = vpop.f32.mrf.mxu0
        %v718 = vadd.f32 0.0, %v717
        %v719 = vpop.f32.mrf.mxu0
        %720 = vdwg.mxu0
        %v721 = vadd.f32 %v643, %v718
        %722 = vrot.lane.b32.xlu0 %v257, 125
        %v723 = vpop.permute.xlu0 %722
        %s724 = scalar_lea.vmem [#allocation2], 48
        %v725 = vld [vmem:[%s724] sm:$0xff]
        %v727 = vsel %vm265, %v725, 0
        %729 = vmatprep.subr.mxu0 0.0
        %730 = vmatpush1.msra.mxu0 0.0
        %731 = vmatprep.subr.mxu0 0.0
        %732 = vmatpush1.msra.mxu0 0.0
        %733 = vmatprep.subr.mxu0 0.0
        %734 = vmatpush1.msra.mxu0 0.0
        %735 = vmatprep.subr.mxu0 0.0
        %736 = vmatpush1.msra.mxu0 0.0
        %737 = vmatprep.subr.mxu0 0.0
        %738 = vmatpush1.msra.mxu0 0.0
        %739 = vmatprep.subr.mxu0 0.0
        %740 = vmatpush1.msra.mxu0 0.0
        %741 = vmatprep.subr.mxu0 0.0
        %742 = vmatpush1.msra.mxu0 0.0
        %743 = vmatprep.subr.mxu0 0.0
        %744 = vmatpush1.msra.mxu0 0.0
        %745 = vmatprep.subr.mxu0 0.0
        %746 = vmatpush1.msra.mxu0 0.0
        %747 = vmatprep.subr.mxu0 0.0
        %748 = vmatpush1.msra.mxu0 0.0
        %749 = vmatprep.subr.mxu0 0.0
        %750 = vmatpush1.msra.mxu0 0.0
        %751 = vmatprep.subr.mxu0 0.0
        %752 = vmatpush1.msra.mxu0 0.0
        %753 = vmatprep.subr.mxu0 0.0
        %754 = vmatpush1.msra.mxu0 0.0
        %755 = vmatprep.subr.mxu0 0.0
        %756 = vmatpush1.msra.mxu0 0.0
        %757 = vmatprep.subr.mxu0 0.0
        %758 = vmatpush1.msra.mxu0 0.0
        %759 = vmatprep.subr.mxu0 0.0
        %760 = vmatpush1.msra.mxu0 %v723
        %761 = vmatprep.subr.mxu0 0.0
        %762 = vmatpush2.msra.mxu0 0.0
        %763 = vmatprep.subr.mxu0 0.0
        %764 = vmatpush2.msra.mxu0 0.0
        %765 = vmatprep.subr.mxu0 0.0
        %766 = vmatpush2.msra.mxu0 0.0
        %767 = vmatprep.subr.mxu0 0.0
        %768 = vmatpush2.msra.mxu0 0.0
        %769 = vmatprep.subr.mxu0 0.0
        %770 = vmatpush2.msra.mxu0 0.0
        %771 = vmatprep.subr.mxu0 0.0
        %772 = vmatpush2.msra.mxu0 0.0
        %773 = vmatprep.subr.mxu0 0.0
        %774 = vmatpush2.msra.mxu0 0.0
        %775 = vmatprep.subr.mxu0 0.0
        %776 = vmatpush2.msra.mxu0 0.0
        %777 = vmatprep.subr.mxu0 0.0
        %778 = vmatpush2.msra.mxu0 0.0
        %779 = vmatprep.subr.mxu0 0.0
        %780 = vmatpush2.msra.mxu0 0.0
        %781 = vmatprep.subr.mxu0 0.0
        %782 = vmatpush2.msra.mxu0 0.0
        %783 = vmatprep.subr.mxu0 0.0
        %784 = vmatpush2.msra.mxu0 0.0
        %785 = vmatprep.subr.mxu0 0.0
        %786 = vmatpush2.msra.mxu0 0.0
        %787 = vmatprep.subr.mxu0 0.0
        %788 = vmatpush2.msra.mxu0 0.0
        %789 = vmatprep.subr.mxu0 0.0
        %790 = vmatpush2.msra.mxu0 0.0
        %791 = vmatprep.subr.mxu0 0.0
        %792 = vmatpush2.msra.mxu0 0.0
        %793 = vmatprep.mubr.f32.mxu0 0.0
        %794 = vmatmul.mubr.f32.gmra.mxu0 %v727
        %v795 = vpop.f32.mrf.mxu0
        %v796 = vadd.f32 0.0, %v795
        %v797 = vpop.f32.mrf.mxu0
        %798 = vdwg.mxu0
        %v799 = vadd.f32 %v721, %v796
        %801 = vset.pattern.permute.xlu0 0
        %802 = vperm.xlu0 %801, %v253
        %v803 = vpop.permute.xlu0 %802
        %v805 = vadd.f32 %v799, %v803
        %v806 = vmax.f32 %v805, 0.0
        %v807 = vsel %vm252, 1, 0
        %vm808 = vcmp.eq.s32.totalorder %v807, 1
        %v809 = vsel %vm808, %v806, 0.0
        %810 = vrot.lane.b32.xlu0 %v809, 3
        %v811 = vpop.permute.xlu0 %810
        %v812 = vld [vmem:[#allocation5] sm:$0xff]
        %813 = vrot.lane.b32.xlu0 %v809, 2
        %v814 = vpop.permute.xlu0 %813
        %s815 = scalar_lea.vmem [#allocation5], 8
        %v816 = vld [vmem:[%s815] sm:$0xff]
        %v818 = vsel %vm265, %v816, 0
        %820 = vmatprep.subr.mxu0 0.0
        %821 = vmatpush1.msra.mxu0 0.0
        %822 = vmatprep.subr.mxu0 0.0
        %823 = vmatpush1.msra.mxu0 0.0
        %824 = vmatprep.subr.mxu0 0.0
        %825 = vmatpush1.msra.mxu0 0.0
        %826 = vmatprep.subr.mxu0 0.0
        %827 = vmatpush1.msra.mxu0 0.0
        %828 = vmatprep.subr.mxu0 0.0
        %829 = vmatpush1.msra.mxu0 0.0
        %830 = vmatprep.subr.mxu0 0.0
        %831 = vmatpush1.msra.mxu0 0.0
        %832 = vmatprep.subr.mxu0 0.0
        %833 = vmatpush1.msra.mxu0 0.0
        %834 = vmatprep.subr.mxu0 0.0
        %835 = vmatpush1.msra.mxu0 0.0
        %836 = vmatprep.subr.mxu0 0.0
        %837 = vmatpush1.msra.mxu0 0.0
        %838 = vmatprep.subr.mxu0 0.0
        %839 = vmatpush1.msra.mxu0 0.0
        %840 = vmatprep.subr.mxu0 0.0
        %841 = vmatpush1.msra.mxu0 0.0
        %842 = vmatprep.subr.mxu0 0.0
        %843 = vmatpush1.msra.mxu0 0.0
        %844 = vmatprep.subr.mxu0 0.0
        %845 = vmatpush1.msra.mxu0 0.0
        %846 = vmatprep.subr.mxu0 0.0
        %847 = vmatpush1.msra.mxu0 0.0
        %848 = vmatprep.subr.mxu0 0.0
        %849 = vmatpush1.msra.mxu0 0.0
        %850 = vmatprep.subr.mxu0 0.0
        %851 = vmatpush1.msra.mxu0 %v814
        %852 = vmatprep.subr.mxu0 0.0
        %853 = vmatpush2.msra.mxu0 0.0
        %854 = vmatprep.subr.mxu0 0.0
        %855 = vmatpush2.msra.mxu0 0.0
        %856 = vmatprep.subr.mxu0 0.0
        %857 = vmatpush2.msra.mxu0 0.0
        %858 = vmatprep.subr.mxu0 0.0
        %859 = vmatpush2.msra.mxu0 0.0
        %860 = vmatprep.subr.mxu0 0.0
        %861 = vmatpush2.msra.mxu0 0.0
        %862 = vmatprep.subr.mxu0 0.0
        %863 = vmatpush2.msra.mxu0 0.0
        %864 = vmatprep.subr.mxu0 0.0
        %865 = vmatpush2.msra.mxu0 0.0
        %866 = vmatprep.subr.mxu0 0.0
        %867 = vmatpush2.msra.mxu0 0.0
        %868 = vmatprep.subr.mxu0 0.0
        %869 = vmatpush2.msra.mxu0 0.0
        %870 = vmatprep.subr.mxu0 0.0
        %871 = vmatpush2.msra.mxu0 0.0
        %872 = vmatprep.subr.mxu0 0.0
        %873 = vmatpush2.msra.mxu0 0.0
        %874 = vmatprep.subr.mxu0 0.0
        %875 = vmatpush2.msra.mxu0 0.0
        %876 = vmatprep.subr.mxu0 0.0
        %877 = vmatpush2.msra.mxu0 0.0
        %878 = vmatprep.subr.mxu0 0.0
        %879 = vmatpush2.msra.mxu0 0.0
        %880 = vmatprep.subr.mxu0 0.0
        %881 = vmatpush2.msra.mxu0 0.0
        %882 = vmatprep.subr.mxu0 0.0
        %883 = vmatpush2.msra.mxu0 0.0
        %884 = vmatprep.mubr.f32.mxu0 0.0
        %885 = vmatmul.mubr.f32.gmra.mxu0 %v818
        %v886 = vpop.f32.mrf.mxu0
        %v887 = vadd.f32 0.0, %v886
        %v888 = vpop.f32.mrf.mxu0
        %889 = vdwg.mxu0
        %v891 = vsel %vm265, %v812, 0
        %893 = vmatprep.subr.mxu0 0.0
        %894 = vmatpush1.msra.mxu0 0.0
        %895 = vmatprep.subr.mxu0 0.0
        %896 = vmatpush1.msra.mxu0 0.0
        %897 = vmatprep.subr.mxu0 0.0
        %898 = vmatpush1.msra.mxu0 0.0
        %899 = vmatprep.subr.mxu0 0.0
        %900 = vmatpush1.msra.mxu0 0.0
        %901 = vmatprep.subr.mxu0 0.0
        %902 = vmatpush1.msra.mxu0 0.0
        %903 = vmatprep.subr.mxu0 0.0
        %904 = vmatpush1.msra.mxu0 0.0
        %905 = vmatprep.subr.mxu0 0.0
        %906 = vmatpush1.msra.mxu0 0.0
        %907 = vmatprep.subr.mxu0 0.0
        %908 = vmatpush1.msra.mxu0 0.0
        %909 = vmatprep.subr.mxu0 0.0
        %910 = vmatpush1.msra.mxu0 0.0
        %911 = vmatprep.subr.mxu0 0.0
        %912 = vmatpush1.msra.mxu0 0.0
        %913 = vmatprep.subr.mxu0 0.0
        %914 = vmatpush1.msra.mxu0 0.0
        %915 = vmatprep.subr.mxu0 0.0
        %916 = vmatpush1.msra.mxu0 0.0
        %917 = vmatprep.subr.mxu0 0.0
        %918 = vmatpush1.msra.mxu0 0.0
        %919 = vmatprep.subr.mxu0 0.0
        %920 = vmatpush1.msra.mxu0 0.0
        %921 = vmatprep.subr.mxu0 0.0
        %922 = vmatpush1.msra.mxu0 0.0
        %923 = vmatprep.subr.mxu0 0.0
        %924 = vmatpush1.msra.mxu0 %v811
        %925 = vmatprep.subr.mxu0 0.0
        %926 = vmatpush2.msra.mxu0 0.0
        %927 = vmatprep.subr.mxu0 0.0
        %928 = vmatpush2.msra.mxu0 0.0
        %929 = vmatprep.subr.mxu0 0.0
        %930 = vmatpush2.msra.mxu0 0.0
        %931 = vmatprep.subr.mxu0 0.0
        %932 = vmatpush2.msra.mxu0 0.0
        %933 = vmatprep.subr.mxu0 0.0
        %934 = vmatpush2.msra.mxu0 0.0
        %935 = vmatprep.subr.mxu0 0.0
        %936 = vmatpush2.msra.mxu0 0.0
        %937 = vmatprep.subr.mxu0 0.0
        %938 = vmatpush2.msra.mxu0 0.0
        %939 = vmatprep.subr.mxu0 0.0
        %940 = vmatpush2.msra.mxu0 0.0
        %941 = vmatprep.subr.mxu0 0.0
        %942 = vmatpush2.msra.mxu0 0.0
        %943 = vmatprep.subr.mxu0 0.0
        %944 = vmatpush2.msra.mxu0 0.0
        %945 = vmatprep.subr.mxu0 0.0
        %946 = vmatpush2.msra.mxu0 0.0
        %947 = vmatprep.subr.mxu0 0.0
        %948 = vmatpush2.msra.mxu0 0.0
        %949 = vmatprep.subr.mxu0 0.0
        %950 = vmatpush2.msra.mxu0 0.0
        %951 = vmatprep.subr.mxu0 0.0
        %952 = vmatpush2.msra.mxu0 0.0
        %953 = vmatprep.subr.mxu0 0.0
        %954 = vmatpush2.msra.mxu0 0.0
        %955 = vmatprep.subr.mxu0 0.0
        %956 = vmatpush2.msra.mxu0 0.0
        %957 = vmatprep.mubr.f32.mxu0 0.0
        %958 = vmatmul.mubr.f32.gmra.mxu0 %v891
        %v959 = vpop.f32.mrf.mxu0
        %v960 = vadd.f32 %v887, %v959
        %v961 = vpop.f32.mrf.mxu0
        %962 = vdwg.mxu0
        %963 = vrot.lane.b32.xlu0 %v809, 1
        %v964 = vpop.permute.xlu0 %963
        %s965 = scalar_lea.vmem [#allocation5], 16
        %v966 = vld [vmem:[%s965] sm:$0xff]
        %v968 = vsel %vm265, %v966, 0
        %970 = vmatprep.subr.mxu0 0.0
        %971 = vmatpush1.msra.mxu0 0.0
        %972 = vmatprep.subr.mxu0 0.0
        %973 = vmatpush1.msra.mxu0 0.0
        %974 = vmatprep.subr.mxu0 0.0
        %975 = vmatpush1.msra.mxu0 0.0
        %976 = vmatprep.subr.mxu0 0.0
        %977 = vmatpush1.msra.mxu0 0.0
        %978 = vmatprep.subr.mxu0 0.0
        %979 = vmatpush1.msra.mxu0 0.0
        %980 = vmatprep.subr.mxu0 0.0
        %981 = vmatpush1.msra.mxu0 0.0
        %982 = vmatprep.subr.mxu0 0.0
        %983 = vmatpush1.msra.mxu0 0.0
        %984 = vmatprep.subr.mxu0 0.0
        %985 = vmatpush1.msra.mxu0 0.0
        %986 = vmatprep.subr.mxu0 0.0
        %987 = vmatpush1.msra.mxu0 0.0
        %988 = vmatprep.subr.mxu0 0.0
        %989 = vmatpush1.msra.mxu0 0.0
        %990 = vmatprep.subr.mxu0 0.0
        %991 = vmatpush1.msra.mxu0 0.0
        %992 = vmatprep.subr.mxu0 0.0
        %993 = vmatpush1.msra.mxu0 0.0
        %994 = vmatprep.subr.mxu0 0.0
        %995 = vmatpush1.msra.mxu0 0.0
        %996 = vmatprep.subr.mxu0 0.0
        %997 = vmatpush1.msra.mxu0 0.0
        %998 = vmatprep.subr.mxu0 0.0
        %999 = vmatpush1.msra.mxu0 0.0
        %1000 = vmatprep.subr.mxu0 0.0
        %1001 = vmatpush1.msra.mxu0 %v964
        %1002 = vmatprep.subr.mxu0 0.0
        %1003 = vmatpush2.msra.mxu0 0.0
        %1004 = vmatprep.subr.mxu0 0.0
        %1005 = vmatpush2.msra.mxu0 0.0
        %1006 = vmatprep.subr.mxu0 0.0
        %1007 = vmatpush2.msra.mxu0 0.0
        %1008 = vmatprep.subr.mxu0 0.0
        %1009 = vmatpush2.msra.mxu0 0.0
        %1010 = vmatprep.subr.mxu0 0.0
        %1011 = vmatpush2.msra.mxu0 0.0
        %1012 = vmatprep.subr.mxu0 0.0
        %1013 = vmatpush2.msra.mxu0 0.0
        %1014 = vmatprep.subr.mxu0 0.0
        %1015 = vmatpush2.msra.mxu0 0.0
        %1016 = vmatprep.subr.mxu0 0.0
        %1017 = vmatpush2.msra.mxu0 0.0
        %1018 = vmatprep.subr.mxu0 0.0
        %1019 = vmatpush2.msra.mxu0 0.0
        %1020 = vmatprep.subr.mxu0 0.0
        %1021 = vmatpush2.msra.mxu0 0.0
        %1022 = vmatprep.subr.mxu0 0.0
        %1023 = vmatpush2.msra.mxu0 0.0
        %1024 = vmatprep.subr.mxu0 0.0
        %1025 = vmatpush2.msra.mxu0 0.0
        %1026 = vmatprep.subr.mxu0 0.0
        %1027 = vmatpush2.msra.mxu0 0.0
        %1028 = vmatprep.subr.mxu0 0.0
        %1029 = vmatpush2.msra.mxu0 0.0
        %1030 = vmatprep.subr.mxu0 0.0
        %1031 = vmatpush2.msra.mxu0 0.0
        %1032 = vmatprep.subr.mxu0 0.0
        %1033 = vmatpush2.msra.mxu0 0.0
        %1034 = vmatprep.mubr.f32.mxu0 0.0
        %1035 = vmatmul.mubr.f32.gmra.mxu0 %v968
        %v1036 = vpop.f32.mrf.mxu0
        %v1037 = vadd.f32 0.0, %v1036
        %v1038 = vpop.f32.mrf.mxu0
        %1039 = vdwg.mxu0
        %v1040 = vadd.f32 %v960, %v1037
        %s1041 = scalar_lea.vmem [#allocation5], 24
        %v1042 = vld [vmem:[%s1041] sm:$0xff]
        %v1044 = vsel %vm265, %v1042, 0
        %1046 = vmatprep.subr.mxu0 0.0
        %1047 = vmatpush1.msra.mxu0 0.0
        %1048 = vmatprep.subr.mxu0 0.0
        %1049 = vmatpush1.msra.mxu0 0.0
        %1050 = vmatprep.subr.mxu0 0.0
        %1051 = vmatpush1.msra.mxu0 0.0
        %1052 = vmatprep.subr.mxu0 0.0
        %1053 = vmatpush1.msra.mxu0 0.0
        %1054 = vmatprep.subr.mxu0 0.0
        %1055 = vmatpush1.msra.mxu0 0.0
        %1056 = vmatprep.subr.mxu0 0.0
        %1057 = vmatpush1.msra.mxu0 0.0
        %1058 = vmatprep.subr.mxu0 0.0
        %1059 = vmatpush1.msra.mxu0 0.0
        %1060 = vmatprep.subr.mxu0 0.0
        %1061 = vmatpush1.msra.mxu0 0.0
        %1062 = vmatprep.subr.mxu0 0.0
        %1063 = vmatpush1.msra.mxu0 0.0
        %1064 = vmatprep.subr.mxu0 0.0
        %1065 = vmatpush1.msra.mxu0 0.0
        %1066 = vmatprep.subr.mxu0 0.0
        %1067 = vmatpush1.msra.mxu0 0.0
        %1068 = vmatprep.subr.mxu0 0.0
        %1069 = vmatpush1.msra.mxu0 0.0
        %1070 = vmatprep.subr.mxu0 0.0
        %1071 = vmatpush1.msra.mxu0 0.0
        %1072 = vmatprep.subr.mxu0 0.0
        %1073 = vmatpush1.msra.mxu0 0.0
        %1074 = vmatprep.subr.mxu0 0.0
        %1075 = vmatpush1.msra.mxu0 0.0
        %1076 = vmatprep.subr.mxu0 0.0
        %1077 = vmatpush1.msra.mxu0 %v809
        %1078 = vmatprep.subr.mxu0 0.0
        %1079 = vmatpush2.msra.mxu0 0.0
        %1080 = vmatprep.subr.mxu0 0.0
        %1081 = vmatpush2.msra.mxu0 0.0
        %1082 = vmatprep.subr.mxu0 0.0
        %1083 = vmatpush2.msra.mxu0 0.0
        %1084 = vmatprep.subr.mxu0 0.0
        %1085 = vmatpush2.msra.mxu0 0.0
        %1086 = vmatprep.subr.mxu0 0.0
        %1087 = vmatpush2.msra.mxu0 0.0
        %1088 = vmatprep.subr.mxu0 0.0
        %1089 = vmatpush2.msra.mxu0 0.0
        %1090 = vmatprep.subr.mxu0 0.0
        %1091 = vmatpush2.msra.mxu0 0.0
        %1092 = vmatprep.subr.mxu0 0.0
        %1093 = vmatpush2.msra.mxu0 0.0
        %1094 = vmatprep.subr.mxu0 0.0
        %1095 = vmatpush2.msra.mxu0 0.0
        %1096 = vmatprep.subr.mxu0 0.0
        %1097 = vmatpush2.msra.mxu0 0.0
        %1098 = vmatprep.subr.mxu0 0.0
        %1099 = vmatpush2.msra.mxu0 0.0
        %1100 = vmatprep.subr.mxu0 0.0
        %1101 = vmatpush2.msra.mxu0 0.0
        %1102 = vmatprep.subr.mxu0 0.0
        %1103 = vmatpush2.msra.mxu0 0.0
        %1104 = vmatprep.subr.mxu0 0.0
        %1105 = vmatpush2.msra.mxu0 0.0
        %1106 = vmatprep.subr.mxu0 0.0
        %1107 = vmatpush2.msra.mxu0 0.0
        %1108 = vmatprep.subr.mxu0 0.0
        %1109 = vmatpush2.msra.mxu0 0.0
        %1110 = vmatprep.mubr.f32.mxu0 0.0
        %1111 = vmatmul.mubr.f32.gmra.mxu0 %v1044
        %v1112 = vpop.f32.mrf.mxu0
        %v1113 = vadd.f32 0.0, %v1112
        %v1114 = vpop.f32.mrf.mxu0
        %1115 = vdwg.mxu0
        %v1116 = vadd.f32 %v1040, %v1113
        %1117 = vrot.lane.b32.xlu0 %v809, 127
        %v1118 = vpop.permute.xlu0 %1117
        %s1119 = scalar_lea.vmem [#allocation5], 32
        %v1120 = vld [vmem:[%s1119] sm:$0xff]
        %v1122 = vsel %vm265, %v1120, 0
        %1124 = vmatprep.subr.mxu0 0.0
        %1125 = vmatpush1.msra.mxu0 0.0
        %1126 = vmatprep.subr.mxu0 0.0
        %1127 = vmatpush1.msra.mxu0 0.0
        %1128 = vmatprep.subr.mxu0 0.0
        %1129 = vmatpush1.msra.mxu0 0.0
        %1130 = vmatprep.subr.mxu0 0.0
        %1131 = vmatpush1.msra.mxu0 0.0
        %1132 = vmatprep.subr.mxu0 0.0
        %1133 = vmatpush1.msra.mxu0 0.0
        %1134 = vmatprep.subr.mxu0 0.0
        %1135 = vmatpush1.msra.mxu0 0.0
        %1136 = vmatprep.subr.mxu0 0.0
        %1137 = vmatpush1.msra.mxu0 0.0
        %1138 = vmatprep.subr.mxu0 0.0
        %1139 = vmatpush1.msra.mxu0 0.0
        %1140 = vmatprep.subr.mxu0 0.0
        %1141 = vmatpush1.msra.mxu0 0.0
        %1142 = vmatprep.subr.mxu0 0.0
        %1143 = vmatpush1.msra.mxu0 0.0
        %1144 = vmatprep.subr.mxu0 0.0
        %1145 = vmatpush1.msra.mxu0 0.0
        %1146 = vmatprep.subr.mxu0 0.0
        %1147 = vmatpush1.msra.mxu0 0.0
        %1148 = vmatprep.subr.mxu0 0.0
        %1149 = vmatpush1.msra.mxu0 0.0
        %1150 = vmatprep.subr.mxu0 0.0
        %1151 = vmatpush1.msra.mxu0 0.0
        %1152 = vmatprep.subr.mxu0 0.0
        %1153 = vmatpush1.msra.mxu0 0.0
        %1154 = vmatprep.subr.mxu0 0.0
        %1155 = vmatpush1.msra.mxu0 %v1118
        %1156 = vmatprep.subr.mxu0 0.0
        %1157 = vmatpush2.msra.mxu0 0.0
        %1158 = vmatprep.subr.mxu0 0.0
        %1159 = vmatpush2.msra.mxu0 0.0
        %1160 = vmatprep.subr.mxu0 0.0
        %1161 = vmatpush2.msra.mxu0 0.0
        %1162 = vmatprep.subr.mxu0 0.0
        %1163 = vmatpush2.msra.mxu0 0.0
        %1164 = vmatprep.subr.mxu0 0.0
        %1165 = vmatpush2.msra.mxu0 0.0
        %1166 = vmatprep.subr.mxu0 0.0
        %1167 = vmatpush2.msra.mxu0 0.0
        %1168 = vmatprep.subr.mxu0 0.0
        %1169 = vmatpush2.msra.mxu0 0.0
        %1170 = vmatprep.subr.mxu0 0.0
        %1171 = vmatpush2.msra.mxu0 0.0
        %1172 = vmatprep.subr.mxu0 0.0
        %1173 = vmatpush2.msra.mxu0 0.0
        %1174 = vmatprep.subr.mxu0 0.0
        %1175 = vmatpush2.msra.mxu0 0.0
        %1176 = vmatprep.subr.mxu0 0.0
        %1177 = vmatpush2.msra.mxu0 0.0
        %1178 = vmatprep.subr.mxu0 0.0
        %1179 = vmatpush2.msra.mxu0 0.0
        %1180 = vmatprep.subr.mxu0 0.0
        %1181 = vmatpush2.msra.mxu0 0.0
        %1182 = vmatprep.subr.mxu0 0.0
        %1183 = vmatpush2.msra.mxu0 0.0
        %1184 = vmatprep.subr.mxu0 0.0
        %1185 = vmatpush2.msra.mxu0 0.0
        %1186 = vmatprep.subr.mxu0 0.0
        %1187 = vmatpush2.msra.mxu0 0.0
        %1188 = vmatprep.mubr.f32.mxu0 0.0
        %1189 = vmatmul.mubr.f32.gmra.mxu0 %v1122
        %v1190 = vpop.f32.mrf.mxu0
        %v1191 = vadd.f32 0.0, %v1190
        %v1192 = vpop.f32.mrf.mxu0
        %1193 = vdwg.mxu0
        %v1194 = vadd.f32 %v1116, %v1191
        %1195 = vrot.lane.b32.xlu0 %v809, 126
        %v1196 = vpop.permute.xlu0 %1195
        %s1197 = scalar_lea.vmem [#allocation5], 40
        %v1198 = vld [vmem:[%s1197] sm:$0xff]
        %v1200 = vsel %vm265, %v1198, 0
        %1202 = vmatprep.subr.mxu0 0.0
        %1203 = vmatpush1.msra.mxu0 0.0
        %1204 = vmatprep.subr.mxu0 0.0
        %1205 = vmatpush1.msra.mxu0 0.0
        %1206 = vmatprep.subr.mxu0 0.0
        %1207 = vmatpush1.msra.mxu0 0.0
        %1208 = vmatprep.subr.mxu0 0.0
        %1209 = vmatpush1.msra.mxu0 0.0
        %1210 = vmatprep.subr.mxu0 0.0
        %1211 = vmatpush1.msra.mxu0 0.0
        %1212 = vmatprep.subr.mxu0 0.0
        %1213 = vmatpush1.msra.mxu0 0.0
        %1214 = vmatprep.subr.mxu0 0.0
        %1215 = vmatpush1.msra.mxu0 0.0
        %1216 = vmatprep.subr.mxu0 0.0
        %1217 = vmatpush1.msra.mxu0 0.0
        %1218 = vmatprep.subr.mxu0 0.0
        %1219 = vmatpush1.msra.mxu0 0.0
        %1220 = vmatprep.subr.mxu0 0.0
        %1221 = vmatpush1.msra.mxu0 0.0
        %1222 = vmatprep.subr.mxu0 0.0
        %1223 = vmatpush1.msra.mxu0 0.0
        %1224 = vmatprep.subr.mxu0 0.0
        %1225 = vmatpush1.msra.mxu0 0.0
        %1226 = vmatprep.subr.mxu0 0.0
        %1227 = vmatpush1.msra.mxu0 0.0
        %1228 = vmatprep.subr.mxu0 0.0
        %1229 = vmatpush1.msra.mxu0 0.0
        %1230 = vmatprep.subr.mxu0 0.0
        %1231 = vmatpush1.msra.mxu0 0.0
        %1232 = vmatprep.subr.mxu0 0.0
        %1233 = vmatpush1.msra.mxu0 %v1196
        %1234 = vmatprep.subr.mxu0 0.0
        %1235 = vmatpush2.msra.mxu0 0.0
        %1236 = vmatprep.subr.mxu0 0.0
        %1237 = vmatpush2.msra.mxu0 0.0
        %1238 = vmatprep.subr.mxu0 0.0
        %1239 = vmatpush2.msra.mxu0 0.0
        %1240 = vmatprep.subr.mxu0 0.0
        %1241 = vmatpush2.msra.mxu0 0.0
        %1242 = vmatprep.subr.mxu0 0.0
        %1243 = vmatpush2.msra.mxu0 0.0
        %1244 = vmatprep.subr.mxu0 0.0
        %1245 = vmatpush2.msra.mxu0 0.0
        %1246 = vmatprep.subr.mxu0 0.0
        %1247 = vmatpush2.msra.mxu0 0.0
        %1248 = vmatprep.subr.mxu0 0.0
        %1249 = vmatpush2.msra.mxu0 0.0
        %1250 = vmatprep.subr.mxu0 0.0
        %1251 = vmatpush2.msra.mxu0 0.0
        %1252 = vmatprep.subr.mxu0 0.0
        %1253 = vmatpush2.msra.mxu0 0.0
        %1254 = vmatprep.subr.mxu0 0.0
        %1255 = vmatpush2.msra.mxu0 0.0
        %1256 = vmatprep.subr.mxu0 0.0
        %1257 = vmatpush2.msra.mxu0 0.0
        %1258 = vmatprep.subr.mxu0 0.0
        %1259 = vmatpush2.msra.mxu0 0.0
        %1260 = vmatprep.subr.mxu0 0.0
        %1261 = vmatpush2.msra.mxu0 0.0
        %1262 = vmatprep.subr.mxu0 0.0
        %1263 = vmatpush2.msra.mxu0 0.0
        %1264 = vmatprep.subr.mxu0 0.0
        %1265 = vmatpush2.msra.mxu0 0.0
        %1266 = vmatprep.mubr.f32.mxu0 0.0
        %1267 = vmatmul.mubr.f32.gmra.mxu0 %v1200
        %v1268 = vpop.f32.mrf.mxu0
        %v1269 = vadd.f32 0.0, %v1268
        %v1270 = vpop.f32.mrf.mxu0
        %1271 = vdwg.mxu0
        %v1272 = vadd.f32 %v1194, %v1269
        %1273 = vrot.lane.b32.xlu0 %v809, 125
        %v1274 = vpop.permute.xlu0 %1273
        %s1275 = scalar_lea.vmem [#allocation5], 48
        %v1276 = vld [vmem:[%s1275] sm:$0xff]
        %v1278 = vsel %vm265, %v1276, 0
        %1280 = vmatprep.subr.mxu0 0.0
        %1281 = vmatpush1.msra.mxu0 0.0
        %1282 = vmatprep.subr.mxu0 0.0
        %1283 = vmatpush1.msra.mxu0 0.0
        %1284 = vmatprep.subr.mxu0 0.0
        %1285 = vmatpush1.msra.mxu0 0.0
        %1286 = vmatprep.subr.mxu0 0.0
        %1287 = vmatpush1.msra.mxu0 0.0
        %1288 = vmatprep.subr.mxu0 0.0
        %1289 = vmatpush1.msra.mxu0 0.0
        %1290 = vmatprep.subr.mxu0 0.0
        %1291 = vmatpush1.msra.mxu0 0.0
        %1292 = vmatprep.subr.mxu0 0.0
        %1293 = vmatpush1.msra.mxu0 0.0
        %1294 = vmatprep.subr.mxu0 0.0
        %1295 = vmatpush1.msra.mxu0 0.0
        %1296 = vmatprep.subr.mxu0 0.0
        %1297 = vmatpush1.msra.mxu0 0.0
        %1298 = vmatprep.subr.mxu0 0.0
        %1299 = vmatpush1.msra.mxu0 0.0
        %1300 = vmatprep.subr.mxu0 0.0
        %1301 = vmatpush1.msra.mxu0 0.0
        %1302 = vmatprep.subr.mxu0 0.0
        %1303 = vmatpush1.msra.mxu0 0.0
        %1304 = vmatprep.subr.mxu0 0.0
        %1305 = vmatpush1.msra.mxu0 0.0
        %1306 = vmatprep.subr.mxu0 0.0
        %1307 = vmatpush1.msra.mxu0 0.0
        %1308 = vmatprep.subr.mxu0 0.0
        %1309 = vmatpush1.msra.mxu0 0.0
        %1310 = vmatprep.subr.mxu0 0.0
        %1311 = vmatpush1.msra.mxu0 %v1274
        %1312 = vmatprep.subr.mxu0 0.0
        %1313 = vmatpush2.msra.mxu0 0.0
        %1314 = vmatprep.subr.mxu0 0.0
        %1315 = vmatpush2.msra.mxu0 0.0
        %1316 = vmatprep.subr.mxu0 0.0
        %1317 = vmatpush2.msra.mxu0 0.0
        %1318 = vmatprep.subr.mxu0 0.0
        %1319 = vmatpush2.msra.mxu0 0.0
        %1320 = vmatprep.subr.mxu0 0.0
        %1321 = vmatpush2.msra.mxu0 0.0
        %1322 = vmatprep.subr.mxu0 0.0
        %1323 = vmatpush2.msra.mxu0 0.0
        %1324 = vmatprep.subr.mxu0 0.0
        %1325 = vmatpush2.msra.mxu0 0.0
        %1326 = vmatprep.subr.mxu0 0.0
        %1327 = vmatpush2.msra.mxu0 0.0
        %1328 = vmatprep.subr.mxu0 0.0
        %1329 = vmatpush2.msra.mxu0 0.0
        %1330 = vmatprep.subr.mxu0 0.0
        %1331 = vmatpush2.msra.mxu0 0.0
        %1332 = vmatprep.subr.mxu0 0.0
        %1333 = vmatpush2.msra.mxu0 0.0
        %1334 = vmatprep.subr.mxu0 0.0
        %1335 = vmatpush2.msra.mxu0 0.0
        %1336 = vmatprep.subr.mxu0 0.0
        %1337 = vmatpush2.msra.mxu0 0.0
        %1338 = vmatprep.subr.mxu0 0.0
        %1339 = vmatpush2.msra.mxu0 0.0
        %1340 = vmatprep.subr.mxu0 0.0
        %1341 = vmatpush2.msra.mxu0 0.0
        %1342 = vmatprep.subr.mxu0 0.0
        %1343 = vmatpush2.msra.mxu0 0.0
        %1344 = vmatprep.mubr.f32.mxu0 0.0
        %1345 = vmatmul.mubr.f32.gmra.mxu0 %v1278
        %v1346 = vpop.f32.mrf.mxu0
        %v1347 = vadd.f32 0.0, %v1346
        %v1348 = vpop.f32.mrf.mxu0
        %1349 = vdwg.mxu0
        %v1350 = vadd.f32 %v1272, %v1347
        %1352 = vset.pattern.permute.xlu0 0
        %1353 = vperm.xlu0 %1352, %v254
        %v1354 = vpop.permute.xlu0 %1353
        %v1356 = vadd.f32 %v1350, %v1354
        %v1357 = vadd.f32 %v1356, %v257
        %v1358 = vmax.f32 %v1357, 0.0
        %1359 = vst [vmem:[%s245] sm:$0xff] %v1358
        %s1360 = sand.u32 %s139, 1
        %s1361 = scalar_lea.sflag [#allocation4], %s1360
        %s1362 = sand.u32 %s139, 1
        %s1363 = smul.addr %s1362, 8
        %s1364 = scalar_lea.vmem [#allocation7], %s1363
        // Predicated region
        $region49: #{tpu_custom_call.1} parent=39 // pred_check
          %p1365 = pneg %p149
        $region50: #{tpu_custom_call.1} parent=39 // pred_check_branch
          %1367 = sbr.rel (%p1365) target = $region52
        $region51: #{tpu_custom_call.1} parent=39 // pred_region
          %s1369 = ssub.s32 128, 128
          %1370 = vsyncadd %s1361, %s1369
          %s1371 = smul.addr %s21, 128
          %s1372 = scalar_lea.hbm %s5, %s1371
          %s1374 = sshll.u32 %s1364, 4
          %s1375 = int_to_ptr.vmem [resolvable:$true] %s1374
          %1377 = dma.vmem_to_hbm [thread:$0]  %s1375, 128, %s1372, %s1361
        $region52: #{tpu_custom_call.1} parent=39 // pred_fallthru
          _
      $region40: #{tpu_custom_call.1} parent=5 // pred_fallthru
        _
      %p1378 = scmp.le.s32.totalorder 2, %s16
      // Predicated region
      $region53: #{tpu_custom_call.1} parent=5 // pred_check
        %p1379 = pneg %p1378
      $region54: #{tpu_custom_call.1} parent=5 // pred_check_branch
        %1381 = sbr.rel (%p1379) target = $region56
      $region55: #{tpu_custom_call.1} parent=5 // pred_region
        %s1382 = ssub.s32 %s16, 2
        // Predicated region
        $region57: #{tpu_custom_call.1} parent=55 // pred_check
          %p1383 = pneg %p155
        $region58: #{tpu_custom_call.1} parent=55 // pred_check_branch
          %1385 = sbr.rel (%p1383) target = $region60
        $region59: #{tpu_custom_call.1} parent=55 // pred_region
          %s1386 = sand.u32 %s140, 1
          %s1387 = scalar_lea.sflag [#allocation4], %s1386
          %s1388 = sand.u32 %s140, 1
          %s1389 = smul.addr %s1388, 8
          %s1390 = scalar_lea.vmem [#allocation7], %s1389
          %1391 = dma.done %s1387, 128
        $region60: #{tpu_custom_call.1} parent=55 // pred_fallthru
          _
      $region56: #{tpu_custom_call.1} parent=5 // pred_fallthru
        _
    $region6: #{tpu_custom_call.1} parent=1 // loop_footer
      %s20 = sadd.s32 1, %s16
    $region7: #{tpu_custom_call.1} parent=1 // loop_footer_branch
      %15 = sbr.rel target = $region3
    $region8: #{tpu_custom_call.1} parent=1 // loop_exit
      _
    %1392 = vsyncpa [#allocation3], 1
    %s1393 = scalar_lea.sflag [#allocation3], 1
    %1394 = vsyncpa %s1393, 1
    %1395 = vsyncpa [#allocation6], 1
    %1396 = vsyncpa [#allocation4], 1
    %s1397 = scalar_lea.sflag [#allocation4], 1
    %1398 = vsyncpa %s1397, 1

</llo_original>
